<compile_context>
chip_gen: v7x
topology: tpu7x:2x2x1
jax: 0.10.0
libtpu: 0.0.40
codegen_flags: <defaults>
</compile_context>

<pallas_src>
import math
import functools

import jax
import jax.numpy as jnp
from jax.experimental import pallas as pl
from jax.experimental.pallas import tpu as pltpu


# ----------------------------- small helpers -------------------------------

def _round_up(x, m):
    return (x + m - 1) // m * m


def _layernorm(x, eps=1e-6):
    # One-pass statistics: var = E[x^2] - mean^2 (two *independent* cross-lane
    # reductions instead of the dependent mean -> mean((x - mu)^2) chain).
    mu = jnp.mean(x, axis=-1, keepdims=True)
    ex2 = jnp.mean(x * x, axis=-1, keepdims=True)
    var = ex2 - mu * mu
    return (x - mu) * jax.lax.rsqrt(var + eps)


def _silu(x):
    return x * jax.nn.sigmoid(x)


# ------------------------------- kernel -------------------------------------

def _make_flowloss_kernel(depth, width, out_c, tm, n_valid_rows, needs_mask):
    W = width
    C = out_c

    def kernel(xt_ref, sy_ref, iv_ref,
               win_ref, bin_ref,
               adaw_ref, adab_ref,
               lng_ref, lnb_ref,
               mw1_ref, mb1_ref, mw2_ref, mb2_ref,
               flw_ref, flb_ref,
               v_ref, sse_ref):
        bf16 = jnp.bfloat16
        sy_b = sy_ref[...]                                   # (tm, W) bf16

        # --- SimpleMLPAdaLN.input_proj: x_t @ W_in + b_in (K = C unpadded) --
        x = jnp.dot(xt_ref[...], win_ref[...],
                    preferred_element_type=jnp.float32) + bin_ref[...]

        # --- ALL adaLN modulations (depth ResBlocks + FinalLayer) fused into
        #     one wide matmul: (tm, W) @ (W, 3W*depth + 2W) -----------------
        ada_all = jnp.dot(sy_b, adaw_ref[...],
                          preferred_element_type=jnp.float32) + adab_ref[...]

        # --- ResBlocks (adaLN modulation, MLP, gated residual) --------------
        # TODO(synk): for real DiT widths/depths, switch to a depth grid axis
        # with per-layer weights streamed via index_map and the residual `x`
        # carried in VMEM scratch (weight stack no longer fits v7x's 64 MiB).
        for d in range(depth):
            off = 3 * W * d
            shift = ada_all[:, off:off + W]
            scale = ada_all[:, off + W:off + 2 * W]
            gate = ada_all[:, off + 2 * W:off + 3 * W]

            hn = _layernorm(x) * lng_ref[d] + lnb_ref[d]      # in_ln (affine)
            hmod = (hn * (1.0 + scale) + shift).astype(bf16)  # modulate
            hmid = _silu(jnp.dot(hmod, mw1_ref[d],
                                 preferred_element_type=jnp.float32)
                         + mb1_ref[d])
            hout = jnp.dot(hmid.astype(bf16), mw2_ref[d],
                           preferred_element_type=jnp.float32) + mb2_ref[d]
            x = x + gate * hout

        # --- FinalLayer (no-affine LN, modulate, linear; lane-padded out) ---
        foff = 3 * W * depth
        shift = ada_all[:, foff:foff + W]
        scale = ada_all[:, foff + W:foff + 2 * W]
        hn = _layernorm(x)
        v = jnp.dot((hn * (1.0 + scale) + shift).astype(bf16), flw_ref[...],
                    preferred_element_type=jnp.float32) + flb_ref[...]

        v_ref[...] = v.astype(v_ref.dtype)        # lane-dense (tm,128) bf16 store

        # --- SSE epilogue from the f32 v (before the bf16 store).  Sublane
        #     partial sums only (pure VPU adds); the wrapper finishes the lane
        #     reduction, keeping the XLU off the MXU-shared vex slots. --------
        diff = v[:, :C] - iv_ref[...]
        sq = diff * diff
        if needs_mask:
            row_ids = jax.lax.broadcasted_iota(jnp.int32, (tm, C), 0)
            valid = (row_ids + pl.program_id(0) * tm) < n_valid_rows
            sq = jnp.where(valid, sq, 0.0)
        partial = sq[0:8, :]
        for i in range(1, tm // 8):
            partial = partial + sq[i * 8:(i + 1) * 8, :]
        sse_ref[...] = partial

    return kernel


# ------------------------------- wrapper ------------------------------------

def flow_loss_forward(params, target, noise, t, z, *, depth, width,
                      freq_dim=256, tm=None):
    """Returns (loss, v[bf16]) — loss = mse(v, noise - target, 'mean')."""
    assert freq_dim % 2 == 0
    N, C = target.shape
    W = width
    bf16 = jnp.bfloat16

    # ---- tiling: 16-aligned (bf16 sublane tile) row tiles; >= 2 and even
    #      tile count when possible so v7x's two TensorCores split the grid --
    if tm is None:
        if N <= 16:
            tm = 16
        else:
            nt = max(2, pl.cdiv(N, 512))
            nt += nt % 2
            tm = _round_up(pl.cdiv(N, nt), 16)
    else:
        tm = _round_up(tm, 16)
    num_tiles = pl.cdiv(N, tm)
    Np = num_tiles * tm
    Cp = _round_up(C, 128)                  # lane-padded v output / final linear
    A = 3 * W * depth + 2 * W               # fused adaLN output width
    needs_mask = (Np != N)

    # ---- host-side prep (XLA-fused under jit) ------------------------------
    def mm(a, w):
        return jnp.dot(a.astype(bf16), w.astype(bf16),
                       preferred_element_type=jnp.float32)

    tc = t[:, None].astype(jnp.float32)
    x_t = target * (1.0 - tc) + noise * tc
    ideal_v = noise - target
    half = freq_dim // 2
    freqs = jnp.exp(-math.log(10000.0)
                    * jnp.arange(half, dtype=jnp.float32) / half)
    args = tc * freqs[None, :]
    tfreq = jnp.concatenate([jnp.cos(args), jnp.sin(args)], axis=-1)
    # TimestepEmbedder MLP + cond_embed + shared SiLU hoisted out of the
    # kernel: streaming sy (N, W) bf16 is fewer HBM bytes than tfreq + z.
    temb = mm(_silu(mm(tfreq, params["tw0"]) + params["tb0"]),
              params["tw2"]) + params["tb2"]
    cemb = mm(z, params["cw"]) + params["cb"]
    sy = _silu(temb + cemb)

    def padrows(a, rows):
        if rows == a.shape[0]:
            return a
        return jnp.pad(a, ((0, rows - a.shape[0]), (0, 0)))

    xt_p = padrows(x_t, Np).astype(bf16)          # (Np, C)  bf16, lanes unpadded
    sy_p = padrows(sy, Np).astype(bf16)           # (Np, W)  bf16
    iv_p = padrows(ideal_v, Np)                   # (Np, C)  f32 for exact SSE

    # ---- weights: matmul operands bf16; biases/LN f32; adaLN fused ---------
    ada_w_all = jnp.concatenate(
        [params["ada_w"].transpose(1, 0, 2).reshape(W, 3 * W * depth),
         params["fada_w"]], axis=-1).astype(bf16)             # (W, A)
    ada_b_all = jnp.concatenate(
        [params["ada_b"].reshape(1, 3 * W * depth), params["fada_b"]], axis=-1)
    flin_w = jnp.pad(params["flin_w"], ((0, 0), (0, Cp - C))).astype(bf16)
    flin_b = jnp.pad(params["flin_b"], ((0, 0), (0, Cp - C)))
    weights = (params["w_in"].astype(bf16), params["b_in"],
               ada_w_all, ada_b_all,
               params["ln_g"], params["ln_b"],
               params["mw1"].astype(bf16), params["mb1"],
               params["mw2"].astype(bf16), params["mb2"],
               flin_w, flin_b)

    def row_spec(feat):
        return pl.BlockSpec((tm, feat), lambda i: (i, 0))

    def full_spec(a):
        # Constant index_map -> block is resident across the row grid.
        # TODO(synk): single-buffer these via pipeline_mode=pl.Buffered(1) to
        # halve the weight VMEM footprint on v7x once widths/depths grow.
        return pl.BlockSpec(a.shape, lambda i, nd=a.ndim: (0,) * nd)

    in_specs = ([row_spec(C), row_spec(W), row_spec(C)]
                + [full_spec(w) for w in weights])
    out_specs = [pl.BlockSpec((tm, Cp), lambda i: (i, 0)),
                 pl.BlockSpec((8, C), lambda i: (i, 0))]
    out_shape = [jax.ShapeDtypeStruct((Np, Cp), bf16),
                 jax.ShapeDtypeStruct((num_tiles * 8, C), jnp.float32)]

    # ---- VMEM budget from actual need (double-buffered), with headroom -----
    block_in = (tm * C * 2 + tm * W * 2 + tm * C * 4
                + sum(int(w.size) * w.dtype.itemsize for w in weights))
    block_out = tm * Cp * 2 + 8 * C * 4
    vmem_limit = int(min(48 * 2**20, max(16 * 2**20, 8 * (block_in + block_out))))

    # ---- advisory cost estimate for XLA's scheduler ------------------------
    mm_flops_per_row = 2 * (C * W + W * A + depth * 2 * W * W + W * Cp)
    bytes_accessed = (int(xt_p.size) * 2 + int(sy_p.size) * 2 + int(iv_p.size) * 4
                      + sum(int(w.size) * w.dtype.itemsize for w in weights)
                      + Np * Cp * 2 + num_tiles * 8 * C * 4)
    cost = pl.CostEstimate(flops=int(Np * mm_flops_per_row),
                           transcendentals=int(Np * W * depth),
                           bytes_accessed=int(bytes_accessed))

    kernel = _make_flowloss_kernel(depth, W, C, tm, N, needs_mask)

    v_pad, sse = pl.pallas_call(
        kernel,
        out_shape=out_shape,
        grid=(num_tiles,),
        in_specs=in_specs,
        out_specs=out_specs,
        compiler_params=pltpu.CompilerParams(
            dimension_semantics=("parallel",),
            vmem_limit_bytes=vmem_limit),
        cost_estimate=cost,
    )(xt_p, sy_p, iv_p, *weights)

    loss = jnp.sum(sse) / (N * C)
    v = v_pad[:N, :C]
    return loss, v


# ----------------------- deterministic synthetic params ---------------------

def init_params(key, target_channels, width, depth, z_channels, freq_dim=256):
    # NOTE: the PyTorch module zero-inits the adaLN / final-linear weights,
    # which would make the net output identically zero.  To actually exercise
    # the kernel we use deterministic xavier-uniform weights and small random
    # biases for every Linear instead.
    def lin(k, fan_in, fan_out):
        limit = math.sqrt(6.0 / (fan_in + fan_out))
        return jax.random.uniform(k, (fan_in, fan_out), jnp.float32,
                                  -limit, limit)

    def bias(k, *shape):
        return 0.02 * jax.random.normal(k, shape, jnp.float32)

    ks = iter(jax.random.split(key, 64))
    W, C, Zc, F, D = width, target_channels, z_channels, freq_dim, depth
    return {
        "w_in": lin(next(ks), C, W), "b_in": bias(next(ks), 1, W),
        "tw0": lin(next(ks), F, W), "tb0": bias(next(ks), 1, W),
        "tw2": lin(next(ks), W, W), "tb2": bias(next(ks), 1, W),
        "cw": lin(next(ks), Zc, W), "cb": bias(next(ks), 1, W),
        "ln_g": jnp.ones((D, W), jnp.float32),
        "ln_b": jnp.zeros((D, W), jnp.float32),
        "ada_w": jnp.stack([lin(next(ks), W, 3 * W) for _ in range(D)]),
        "ada_b": bias(next(ks), D, 3 * W),
        "mw1": jnp.stack([lin(next(ks), W, W) for _ in range(D)]),
        "mb1": bias(next(ks), D, W),
        "mw2": jnp.stack([lin(next(ks), W, W) for _ in range(D)]),
        "mb2": bias(next(ks), D, W),
        "fada_w": lin(next(ks), W, 2 * W),
        "fada_b": bias(next(ks), 1, 2 * W),
        "flin_w": lin(next(ks), W, C),
        "flin_b": bias(next(ks), 1, C),
    }


# ------------------------------ pure-JAX reference ---------------------------
# Mirrors the kernel's mixed precision (bf16 matmul operands, f32 accumulate,
# f32 LayerNorm / biases / reduction) so the comparison is apples-to-apples.

def reference_forward(params, target, noise, t, z, *, depth, width,
                      freq_dim=256):
    W = width
    bf16 = jnp.bfloat16

    def mm(a, w):
        return jnp.dot(a.astype(bf16), w.astype(bf16),
                       preferred_element_type=jnp.float32)

    tc = t[:, None]
    x_t = target * (1.0 - tc) + noise * tc
    half = freq_dim // 2
    freqs = jnp.exp(-math.log(10000.0)
                    * jnp.arange(half, dtype=jnp.float32) / half)
    args = tc * freqs[None, :]
    tfreq = jnp.concatenate([jnp.cos(args), jnp.sin(args)], axis=-1)

    x = mm(x_t, params["w_in"]) + params["b_in"]
    h = jax.nn.silu(mm(tfreq, params["tw0"]) + params["tb0"])
    temb = mm(h, params["tw2"]) + params["tb2"]
    cemb = mm(z, params["cw"]) + params["cb"]
    sy = jax.nn.silu(temb + cemb)
    for d in range(depth):
        ada = mm(sy, params["ada_w"][d]) + params["ada_b"][d]
        shift, scale, gate = ada[:, :W], ada[:, W:2 * W], ada[:, 2 * W:]
        hn = _layernorm(x) * params["ln_g"][d] + params["ln_b"][d]
        hmid = jax.nn.silu(mm(hn * (1.0 + scale) + shift, params["mw1"][d])
                           + params["mb1"][d])
        hout = mm(hmid, params["mw2"][d]) + params["mb2"][d]
        x = x + gate * hout
    fada = mm(sy, params["fada_w"]) + params["fada_b"]
    shift, scale = fada[:, :W], fada[:, W:]
    v = mm(_layernorm(x) * (1.0 + scale) + shift, params["flin_w"]) \
        + params["flin_b"]
    ideal_v = noise - target
    return jnp.mean(jnp.square(v - ideal_v)), v


# ---------------------------------- main -------------------------------------

if __name__ == "__main__":
    # FlowLoss(target_channels=16, depth=2, width=128, z_channels=32)
    # forward(target: [B, S, C], z: [B, S, Zc]) with B=2, S=12 -> 24 rows,
    # which exercises both the multi-tile grid (2 tiles) and the padded-row
    # mask path of the SSE epilogue.
    B, S = 2, 12
    target_channels = 16
    depth = 2
    width = 128
    z_channels = 32

    key = jax.random.PRNGKey(0)
    k_par, k_tgt, k_z, k_t, k_n = jax.random.split(key, 5)

    params = init_params(k_par, target_channels, width, depth, z_channels)

    target3 = jax.random.normal(k_tgt, (B, S, target_channels), jnp.float32)
    z3 = jax.random.normal(k_z, (B, S, z_channels), jnp.float32)

    # the module reshapes 3-D inputs to [B*S, C]
    target = target3.reshape(-1, target_channels)
    z = z3.reshape(-1, z_channels)
    N = target.shape[0]

    # the forward's torch.rand / torch.randn, drawn deterministically here
    t = jax.random.uniform(k_t, (N,), jnp.float32)
    noise = jax.random.normal(k_n, (N, target_channels), jnp.float32)

    fwd = jax.jit(functools.partial(flow_loss_forward,
                                    depth=depth, width=width))
    loss, v = fwd(params, target, noise, t, z)
    loss = jax.block_until_ready(loss)
    v = jax.block_until_ready(v)

    ref_loss, ref_v = reference_forward(params, target, noise, t, z,
                                        depth=depth, width=width)
    # kernel emits v as bf16 (loss is computed in-kernel from the f32 v)
    ref_v_b = ref_v.astype(jnp.bfloat16).astype(jnp.float32)
    assert jnp.allclose(v.astype(jnp.float32), ref_v_b,
                        atol=2e-2, rtol=2e-2), "v mismatch"
    assert jnp.allclose(loss, ref_loss, atol=1e-4, rtol=5e-3), "loss mismatch"

    # TODO(synk): norm_target / moving_avg_std / unit_norm / norm_v branches
    # (all default-False) and the moving-average buffer update are not
    # exercised; pretrained_path checkpoint loading is intentionally omitted.
    print("KERNEL_OK")
</pallas_src>

<mosaic_0001>
module attributes {stable_mosaic.version = 11 : i64} {
  func.func @kernel(%arg0: i32, %arg1: memref<16x16xbf16, #tpu.memory_space<vmem>>, %arg2: memref<16x128xbf16, #tpu.memory_space<vmem>>, %arg3: memref<16x16xf32, #tpu.memory_space<vmem>>, %arg4: memref<16x128xbf16, #tpu.memory_space<vmem>>, %arg5: memref<1x128xf32, #tpu.memory_space<vmem>>, %arg6: memref<128x1024xbf16, #tpu.memory_space<vmem>>, %arg7: memref<1x1024xf32, #tpu.memory_space<vmem>>, %arg8: memref<2x128xf32, #tpu.memory_space<vmem>>, %arg9: memref<2x128xf32, #tpu.memory_space<vmem>>, %arg10: memref<2x128x128xbf16, #tpu.memory_space<vmem>>, %arg11: memref<2x128xf32, #tpu.memory_space<vmem>>, %arg12: memref<2x128x128xbf16, #tpu.memory_space<vmem>>, %arg13: memref<2x128xf32, #tpu.memory_space<vmem>>, %arg14: memref<128x128xbf16, #tpu.memory_space<vmem>>, %arg15: memref<1x128xf32, #tpu.memory_space<vmem>>, %arg16: memref<16x128xbf16, #tpu.memory_space<vmem>>, %arg17: memref<8x16xf32, #tpu.memory_space<vmem>>) attributes {dimension_semantics = [#tpu.dimension_semantics<parallel>], iteration_bounds = array<i64: 2>, scalar_prefetch = 0 : i64, scratch_operands = 0 : i64, tpu.core_type = #tpu.core_type<tc>, window_params = [{transform_indices = @transform_0, window_bounds = array<i64: 16, 16>}, {transform_indices = @transform_1, window_bounds = array<i64: 16, 128>}, {transform_indices = @transform_2, window_bounds = array<i64: 16, 16>}, {pipeline_mode = #tpu.pipeline_mode<synchronous>, transform_indices = @transform_3, window_bounds = array<i64: 16, 128>}, {pipeline_mode = #tpu.pipeline_mode<synchronous>, transform_indices = @transform_4, window_bounds = array<i64: 1, 128>}, {pipeline_mode = #tpu.pipeline_mode<synchronous>, transform_indices = @transform_5, window_bounds = array<i64: 128, 1024>}, {pipeline_mode = #tpu.pipeline_mode<synchronous>, transform_indices = @transform_6, window_bounds = array<i64: 1, 1024>}, {pipeline_mode = #tpu.pipeline_mode<synchronous>, transform_indices = @transform_7, window_bounds = array<i64: 2, 128>}, {pipeline_mode = #tpu.pipeline_mode<synchronous>, transform_indices = @transform_8, window_bounds = array<i64: 2, 128>}, {pipeline_mode = #tpu.pipeline_mode<synchronous>, transform_indices = @transform_9, window_bounds = array<i64: 2, 128, 128>}, {pipeline_mode = #tpu.pipeline_mode<synchronous>, transform_indices = @transform_10, window_bounds = array<i64: 2, 128>}, {pipeline_mode = #tpu.pipeline_mode<synchronous>, transform_indices = @transform_11, window_bounds = array<i64: 2, 128, 128>}, {pipeline_mode = #tpu.pipeline_mode<synchronous>, transform_indices = @transform_12, window_bounds = array<i64: 2, 128>}, {pipeline_mode = #tpu.pipeline_mode<synchronous>, transform_indices = @transform_13, window_bounds = array<i64: 128, 128>}, {pipeline_mode = #tpu.pipeline_mode<synchronous>, transform_indices = @transform_14, window_bounds = array<i64: 1, 128>}, {transform_indices = @transform_15, window_bounds = array<i64: 16, 128>}, {transform_indices = @transform_16, window_bounds = array<i64: 8, 16>}]} {
    %c0 = arith.constant 0 : index
    %c0_0 = arith.constant 0 : index
    %0 = vector.load %arg2[%c0, %c0_0] : memref<16x128xbf16, #tpu.memory_space<vmem>>, vector<16x128xbf16>
    %c0_1 = arith.constant 0 : index
    %c0_2 = arith.constant 0 : index
    %1 = vector.load %arg1[%c0_1, %c0_2] : memref<16x16xbf16, #tpu.memory_space<vmem>>, vector<16x16xbf16>
    %c0_3 = arith.constant 0 : index
    %c0_4 = arith.constant 0 : index
    %2 = vector.load %arg4[%c0_3, %c0_4] : memref<16x128xbf16, #tpu.memory_space<vmem>>, vector<16x128xbf16>
    %cst = arith.constant dense<0.000000e+00> : vector<16x128xf32>
    %3 = tpu.matmul %1, %2, %cst {dimension_numbers = #tpu.dot_dimension_numbers<[1], [0], [0], [1], [0, 0, 1, 1], [], []>} : vector<16x16xbf16>, vector<16x128xbf16>, vector<16x128xf32> -> vector<16x128xf32>
    %c0_5 = arith.constant 0 : index
    %c0_6 = arith.constant 0 : index
    %4 = vector.load %arg5[%c0_5, %c0_6] : memref<1x128xf32, #tpu.memory_space<vmem>>, vector<1x128xf32>
    %5 = vector.broadcast %4 : vector<1x128xf32> to vector<16x128xf32>
    %6 = arith.addf %3, %5 : vector<16x128xf32>
    %c0_7 = arith.constant 0 : index
    %c0_8 = arith.constant 0 : index
    %7 = vector.load %arg6[%c0_7, %c0_8] : memref<128x1024xbf16, #tpu.memory_space<vmem>>, vector<128x1024xbf16>
    %cst_9 = arith.constant dense<0.000000e+00> : vector<16x1024xf32>
    %8 = tpu.matmul %0, %7, %cst_9 {dimension_numbers = #tpu.dot_dimension_numbers<[1], [0], [0], [1], [0, 0, 1, 1], [], []>} : vector<16x128xbf16>, vector<128x1024xbf16>, vector<16x1024xf32> -> vector<16x1024xf32>
    %c0_10 = arith.constant 0 : index
    %c0_11 = arith.constant 0 : index
    %9 = vector.load %arg7[%c0_10, %c0_11] : memref<1x1024xf32, #tpu.memory_space<vmem>>, vector<1x1024xf32>
    %10 = vector.broadcast %9 : vector<1x1024xf32> to vector<16x1024xf32>
    %11 = arith.addf %8, %10 : vector<16x1024xf32>
    %12 = vector.extract_strided_slice %11 {offsets = [0, 0], sizes = [16, 128], strides = [1, 1]} : vector<16x1024xf32> to vector<16x128xf32>
    %13 = vector.extract_strided_slice %11 {offsets = [0, 128], sizes = [16, 128], strides = [1, 1]} : vector<16x1024xf32> to vector<16x128xf32>
    %14 = vector.extract_strided_slice %11 {offsets = [0, 256], sizes = [16, 128], strides = [1, 1]} : vector<16x1024xf32> to vector<16x128xf32>
    %cst_12 = arith.constant dense<0.000000e+00> : vector<16xf32>
    %15 = vector.multi_reduction <add>, %6, %cst_12 [1] : vector<16x128xf32> to vector<16xf32>
    %16 = vector.shape_cast %15 : vector<16xf32> to vector<16x1xf32>
    %cst_13 = arith.constant 1.280000e+02 : f32
    %17 = vector.broadcast %cst_13 : f32 to vector<16x1xf32>
    %18 = arith.divf %16, %17 : vector<16x1xf32>
    %19 = arith.mulf %6, %6 : vector<16x128xf32>
    %cst_14 = arith.constant dense<0.000000e+00> : vector<16xf32>
    %20 = vector.multi_reduction <add>, %19, %cst_14 [1] : vector<16x128xf32> to vector<16xf32>
    %21 = vector.shape_cast %20 : vector<16xf32> to vector<16x1xf32>
    %cst_15 = arith.constant 1.280000e+02 : f32
    %22 = vector.broadcast %cst_15 : f32 to vector<16x1xf32>
    %23 = arith.divf %21, %22 : vector<16x1xf32>
    %24 = arith.mulf %18, %18 : vector<16x1xf32>
    %25 = arith.subf %23, %24 : vector<16x1xf32>
    %26 = vector.broadcast %18 : vector<16x1xf32> to vector<16x128xf32>
    %27 = arith.subf %6, %26 : vector<16x128xf32>
    %cst_16 = arith.constant 9.99999997E-7 : f32
    %28 = vector.broadcast %cst_16 : f32 to vector<16x1xf32>
    %29 = arith.addf %25, %28 : vector<16x1xf32>
    %30 = math.rsqrt %29 : vector<16x1xf32>
    %31 = vector.broadcast %30 : vector<16x1xf32> to vector<16x128xf32>
    %32 = arith.mulf %27, %31 : vector<16x128xf32>
    %c0_17 = arith.constant 0 : index
    %c0_18 = arith.constant 0 : index
    %33 = vector.load %arg8[%c0_17, %c0_18] : memref<2x128xf32, #tpu.memory_space<vmem>>, vector<1x128xf32>
    %34 = vector.shape_cast %33 : vector<1x128xf32> to vector<128xf32>
    %35 = vector.shape_cast %34 : vector<128xf32> to vector<1x128xf32>
    %36 = vector.broadcast %35 : vector<1x128xf32> to vector<16x128xf32>
    %37 = arith.mulf %32, %36 : vector<16x128xf32>
    %c0_19 = arith.constant 0 : index
    %c0_20 = arith.constant 0 : index
    %38 = vector.load %arg9[%c0_19, %c0_20] : memref<2x128xf32, #tpu.memory_space<vmem>>, vector<1x128xf32>
    %39 = vector.shape_cast %38 : vector<1x128xf32> to vector<128xf32>
    %40 = vector.shape_cast %39 : vector<128xf32> to vector<1x128xf32>
    %41 = vector.broadcast %40 : vector<1x128xf32> to vector<16x128xf32>
    %42 = arith.addf %37, %41 : vector<16x128xf32>
    %cst_21 = arith.constant 1.000000e+00 : f32
    %43 = vector.broadcast %cst_21 : f32 to vector<16x128xf32>
    %44 = arith.addf %43, %13 : vector<16x128xf32>
    %45 = arith.mulf %42, %44 : vector<16x128xf32>
    %46 = arith.addf %45, %12 : vector<16x128xf32>
    %47 = arith.truncf %46 : vector<16x128xf32> to vector<16x128xbf16>
    %c0_22 = arith.constant 0 : index
    %c0_23 = arith.constant 0 : index
    %c0_24 = arith.constant 0 : index
    %48 = vector.load %arg10[%c0_22, %c0_23, %c0_24] : memref<2x128x128xbf16, #tpu.memory_space<vmem>>, vector<1x128x128xbf16>
    %49 = vector.shape_cast %48 : vector<1x128x128xbf16> to vector<128x128xbf16>
    %cst_25 = arith.constant dense<0.000000e+00> : vector<16x128xf32>
    %50 = tpu.matmul %47, %49, %cst_25 {dimension_numbers = #tpu.dot_dimension_numbers<[1], [0], [0], [1], [0, 0, 1, 1], [], []>} : vector<16x128xbf16>, vector<128x128xbf16>, vector<16x128xf32> -> vector<16x128xf32>
    %c0_26 = arith.constant 0 : index
    %c0_27 = arith.constant 0 : index
    %51 = vector.load %arg11[%c0_26, %c0_27] : memref<2x128xf32, #tpu.memory_space<vmem>>, vector<1x128xf32>
    %52 = vector.shape_cast %51 : vector<1x128xf32> to vector<128xf32>
    %53 = vector.shape_cast %52 : vector<128xf32> to vector<1x128xf32>
    %54 = vector.broadcast %53 : vector<1x128xf32> to vector<16x128xf32>
    %55 = arith.addf %50, %54 : vector<16x128xf32>
    %56 = arith.negf %55 : vector<16x128xf32>
    %57 = math.exp %56 : vector<16x128xf32>
    %cst_28 = arith.constant 1.000000e+00 : f32
    %58 = vector.broadcast %cst_28 : f32 to vector<16x128xf32>
    %59 = arith.addf %58, %57 : vector<16x128xf32>
    %60 = arith.divf %58, %59 : vector<16x128xf32>
    %61 = arith.mulf %55, %60 : vector<16x128xf32>
    %62 = arith.truncf %61 : vector<16x128xf32> to vector<16x128xbf16>
    %c0_29 = arith.constant 0 : index
    %c0_30 = arith.constant 0 : index
    %c0_31 = arith.constant 0 : index
    %63 = vector.load %arg12[%c0_29, %c0_30, %c0_31] : memref<2x128x128xbf16, #tpu.memory_space<vmem>>, vector<1x128x128xbf16>
    %64 = vector.shape_cast %63 : vector<1x128x128xbf16> to vector<128x128xbf16>
    %cst_32 = arith.constant dense<0.000000e+00> : vector<16x128xf32>
    %65 = tpu.matmul %62, %64, %cst_32 {dimension_numbers = #tpu.dot_dimension_numbers<[1], [0], [0], [1], [0, 0, 1, 1], [], []>} : vector<16x128xbf16>, vector<128x128xbf16>, vector<16x128xf32> -> vector<16x128xf32>
    %c0_33 = arith.constant 0 : index
    %c0_34 = arith.constant 0 : index
    %66 = vector.load %arg13[%c0_33, %c0_34] : memref<2x128xf32, #tpu.memory_space<vmem>>, vector<1x128xf32>
    %67 = vector.shape_cast %66 : vector<1x128xf32> to vector<128xf32>
    %68 = vector.shape_cast %67 : vector<128xf32> to vector<1x128xf32>
    %69 = vector.broadcast %68 : vector<1x128xf32> to vector<16x128xf32>
    %70 = arith.addf %65, %69 : vector<16x128xf32>
    %71 = arith.mulf %14, %70 : vector<16x128xf32>
    %72 = arith.addf %6, %71 : vector<16x128xf32>
    %73 = vector.extract_strided_slice %11 {offsets = [0, 384], sizes = [16, 128], strides = [1, 1]} : vector<16x1024xf32> to vector<16x128xf32>
    %74 = vector.extract_strided_slice %11 {offsets = [0, 512], sizes = [16, 128], strides = [1, 1]} : vector<16x1024xf32> to vector<16x128xf32>
    %75 = vector.extract_strided_slice %11 {offsets = [0, 640], sizes = [16, 128], strides = [1, 1]} : vector<16x1024xf32> to vector<16x128xf32>
    %cst_35 = arith.constant dense<0.000000e+00> : vector<16xf32>
    %76 = vector.multi_reduction <add>, %72, %cst_35 [1] : vector<16x128xf32> to vector<16xf32>
    %77 = vector.shape_cast %76 : vector<16xf32> to vector<16x1xf32>
    %cst_36 = arith.constant 1.280000e+02 : f32
    %78 = vector.broadcast %cst_36 : f32 to vector<16x1xf32>
    %79 = arith.divf %77, %78 : vector<16x1xf32>
    %80 = arith.mulf %72, %72 : vector<16x128xf32>
    %cst_37 = arith.constant dense<0.000000e+00> : vector<16xf32>
    %81 = vector.multi_reduction <add>, %80, %cst_37 [1] : vector<16x128xf32> to vector<16xf32>
    %82 = vector.shape_cast %81 : vector<16xf32> to vector<16x1xf32>
    %cst_38 = arith.constant 1.280000e+02 : f32
    %83 = vector.broadcast %cst_38 : f32 to vector<16x1xf32>
    %84 = arith.divf %82, %83 : vector<16x1xf32>
    %85 = arith.mulf %79, %79 : vector<16x1xf32>
    %86 = arith.subf %84, %85 : vector<16x1xf32>
    %87 = vector.broadcast %79 : vector<16x1xf32> to vector<16x128xf32>
    %88 = arith.subf %72, %87 : vector<16x128xf32>
    %cst_39 = arith.constant 9.99999997E-7 : f32
    %89 = vector.broadcast %cst_39 : f32 to vector<16x1xf32>
    %90 = arith.addf %86, %89 : vector<16x1xf32>
    %91 = math.rsqrt %90 : vector<16x1xf32>
    %92 = vector.broadcast %91 : vector<16x1xf32> to vector<16x128xf32>
    %93 = arith.mulf %88, %92 : vector<16x128xf32>
    %c1 = arith.constant 1 : index
    %c0_40 = arith.constant 0 : index
    %94 = vector.load %arg8[%c1, %c0_40] : memref<2x128xf32, #tpu.memory_space<vmem>>, vector<1x128xf32>
    %95 = vector.shape_cast %94 : vector<1x128xf32> to vector<128xf32>
    %96 = vector.shape_cast %95 : vector<128xf32> to vector<1x128xf32>
    %97 = vector.broadcast %96 : vector<1x128xf32> to vector<16x128xf32>
    %98 = arith.mulf %93, %97 : vector<16x128xf32>
    %c1_41 = arith.constant 1 : index
    %c0_42 = arith.constant 0 : index
    %99 = vector.load %arg9[%c1_41, %c0_42] : memref<2x128xf32, #tpu.memory_space<vmem>>, vector<1x128xf32>
    %100 = vector.shape_cast %99 : vector<1x128xf32> to vector<128xf32>
    %101 = vector.shape_cast %100 : vector<128xf32> to vector<1x128xf32>
    %102 = vector.broadcast %101 : vector<1x128xf32> to vector<16x128xf32>
    %103 = arith.addf %98, %102 : vector<16x128xf32>
    %cst_43 = arith.constant 1.000000e+00 : f32
    %104 = vector.broadcast %cst_43 : f32 to vector<16x128xf32>
    %105 = arith.addf %104, %74 : vector<16x128xf32>
    %106 = arith.mulf %103, %105 : vector<16x128xf32>
    %107 = arith.addf %106, %73 : vector<16x128xf32>
    %108 = arith.truncf %107 : vector<16x128xf32> to vector<16x128xbf16>
    %c1_44 = arith.constant 1 : index
    %c0_45 = arith.constant 0 : index
    %c0_46 = arith.constant 0 : index
    %109 = vector.load %arg10[%c1_44, %c0_45, %c0_46] : memref<2x128x128xbf16, #tpu.memory_space<vmem>>, vector<1x128x128xbf16>
    %110 = vector.shape_cast %109 : vector<1x128x128xbf16> to vector<128x128xbf16>
    %cst_47 = arith.constant dense<0.000000e+00> : vector<16x128xf32>
    %111 = tpu.matmul %108, %110, %cst_47 {dimension_numbers = #tpu.dot_dimension_numbers<[1], [0], [0], [1], [0, 0, 1, 1], [], []>} : vector<16x128xbf16>, vector<128x128xbf16>, vector<16x128xf32> -> vector<16x128xf32>
    %c1_48 = arith.constant 1 : index
    %c0_49 = arith.constant 0 : index
    %112 = vector.load %arg11[%c1_48, %c0_49] : memref<2x128xf32, #tpu.memory_space<vmem>>, vector<1x128xf32>
    %113 = vector.shape_cast %112 : vector<1x128xf32> to vector<128xf32>
    %114 = vector.shape_cast %113 : vector<128xf32> to vector<1x128xf32>
    %115 = vector.broadcast %114 : vector<1x128xf32> to vector<16x128xf32>
    %116 = arith.addf %111, %115 : vector<16x128xf32>
    %117 = arith.negf %116 : vector<16x128xf32>
    %118 = math.exp %117 : vector<16x128xf32>
    %cst_50 = arith.constant 1.000000e+00 : f32
    %119 = vector.broadcast %cst_50 : f32 to vector<16x128xf32>
    %120 = arith.addf %119, %118 : vector<16x128xf32>
    %121 = arith.divf %119, %120 : vector<16x128xf32>
    %122 = arith.mulf %116, %121 : vector<16x128xf32>
    %123 = arith.truncf %122 : vector<16x128xf32> to vector<16x128xbf16>
    %c1_51 = arith.constant 1 : index
    %c0_52 = arith.constant 0 : index
    %c0_53 = arith.constant 0 : index
    %124 = vector.load %arg12[%c1_51, %c0_52, %c0_53] : memref<2x128x128xbf16, #tpu.memory_space<vmem>>, vector<1x128x128xbf16>
    %125 = vector.shape_cast %124 : vector<1x128x128xbf16> to vector<128x128xbf16>
    %cst_54 = arith.constant dense<0.000000e+00> : vector<16x128xf32>
    %126 = tpu.matmul %123, %125, %cst_54 {dimension_numbers = #tpu.dot_dimension_numbers<[1], [0], [0], [1], [0, 0, 1, 1], [], []>} : vector<16x128xbf16>, vector<128x128xbf16>, vector<16x128xf32> -> vector<16x128xf32>
    %c1_55 = arith.constant 1 : index
    %c0_56 = arith.constant 0 : index
    %127 = vector.load %arg13[%c1_55, %c0_56] : memref<2x128xf32, #tpu.memory_space<vmem>>, vector<1x128xf32>
    %128 = vector.shape_cast %127 : vector<1x128xf32> to vector<128xf32>
    %129 = vector.shape_cast %128 : vector<128xf32> to vector<1x128xf32>
    %130 = vector.broadcast %129 : vector<1x128xf32> to vector<16x128xf32>
    %131 = arith.addf %126, %130 : vector<16x128xf32>
    %132 = arith.mulf %75, %131 : vector<16x128xf32>
    %133 = arith.addf %72, %132 : vector<16x128xf32>
    %134 = vector.extract_strided_slice %11 {offsets = [0, 768], sizes = [16, 128], strides = [1, 1]} : vector<16x1024xf32> to vector<16x128xf32>
    %135 = vector.extract_strided_slice %11 {offsets = [0, 896], sizes = [16, 128], strides = [1, 1]} : vector<16x1024xf32> to vector<16x128xf32>
    %cst_57 = arith.constant dense<0.000000e+00> : vector<16xf32>
    %136 = vector.multi_reduction <add>, %133, %cst_57 [1] : vector<16x128xf32> to vector<16xf32>
    %137 = vector.shape_cast %136 : vector<16xf32> to vector<16x1xf32>
    %cst_58 = arith.constant 1.280000e+02 : f32
    %138 = vector.broadcast %cst_58 : f32 to vector<16x1xf32>
    %139 = arith.divf %137, %138 : vector<16x1xf32>
    %140 = arith.mulf %133, %133 : vector<16x128xf32>
    %cst_59 = arith.constant dense<0.000000e+00> : vector<16xf32>
    %141 = vector.multi_reduction <add>, %140, %cst_59 [1] : vector<16x128xf32> to vector<16xf32>
    %142 = vector.shape_cast %141 : vector<16xf32> to vector<16x1xf32>
    %cst_60 = arith.constant 1.280000e+02 : f32
    %143 = vector.broadcast %cst_60 : f32 to vector<16x1xf32>
    %144 = arith.divf %142, %143 : vector<16x1xf32>
    %145 = arith.mulf %139, %139 : vector<16x1xf32>
    %146 = arith.subf %144, %145 : vector<16x1xf32>
    %147 = vector.broadcast %139 : vector<16x1xf32> to vector<16x128xf32>
    %148 = arith.subf %133, %147 : vector<16x128xf32>
    %cst_61 = arith.constant 9.99999997E-7 : f32
    %149 = vector.broadcast %cst_61 : f32 to vector<16x1xf32>
    %150 = arith.addf %146, %149 : vector<16x1xf32>
    %151 = math.rsqrt %150 : vector<16x1xf32>
    %152 = vector.broadcast %151 : vector<16x1xf32> to vector<16x128xf32>
    %153 = arith.mulf %148, %152 : vector<16x128xf32>
    %cst_62 = arith.constant 1.000000e+00 : f32
    %154 = vector.broadcast %cst_62 : f32 to vector<16x128xf32>
    %155 = arith.addf %154, %135 : vector<16x128xf32>
    %156 = arith.mulf %153, %155 : vector<16x128xf32>
    %157 = arith.addf %156, %134 : vector<16x128xf32>
    %158 = arith.truncf %157 : vector<16x128xf32> to vector<16x128xbf16>
    %c0_63 = arith.constant 0 : index
    %c0_64 = arith.constant 0 : index
    %159 = vector.load %arg14[%c0_63, %c0_64] : memref<128x128xbf16, #tpu.memory_space<vmem>>, vector<128x128xbf16>
    %cst_65 = arith.constant dense<0.000000e+00> : vector<16x128xf32>
    %160 = tpu.matmul %158, %159, %cst_65 {dimension_numbers = #tpu.dot_dimension_numbers<[1], [0], [0], [1], [0, 0, 1, 1], [], []>} : vector<16x128xbf16>, vector<128x128xbf16>, vector<16x128xf32> -> vector<16x128xf32>
    %c0_66 = arith.constant 0 : index
    %c0_67 = arith.constant 0 : index
    %161 = vector.load %arg15[%c0_66, %c0_67] : memref<1x128xf32, #tpu.memory_space<vmem>>, vector<1x128xf32>
    %162 = vector.broadcast %161 : vector<1x128xf32> to vector<16x128xf32>
    %163 = arith.addf %160, %162 : vector<16x128xf32>
    %164 = arith.truncf %163 : vector<16x128xf32> to vector<16x128xbf16>
    %c0_68 = arith.constant 0 : index
    %c0_69 = arith.constant 0 : index
    %165 = vector.load %arg16[%c0_68, %c0_69] : memref<16x128xbf16, #tpu.memory_space<vmem>>, vector<16x128xbf16>
    tpu.vector_store %arg16[%c0_68, %c0_69], %164 {strides = array<i32>} : memref<16x128xbf16, #tpu.memory_space<vmem>>, vector<16x128xbf16>,
    %166 = vector.extract_strided_slice %163 {offsets = [0, 0], sizes = [16, 16], strides = [1, 1]} : vector<16x128xf32> to vector<16x16xf32>
    %c0_70 = arith.constant 0 : index
    %c0_71 = arith.constant 0 : index
    %167 = vector.load %arg3[%c0_70, %c0_71] : memref<16x16xf32, #tpu.memory_space<vmem>>, vector<16x16xf32>
    %168 = arith.subf %166, %167 : vector<16x16xf32>
    %169 = arith.mulf %168, %168 : vector<16x16xf32>
    %170 = tpu.iota {dimensions = array<i32: 0>} : vector<16x16xi32>
    %c16_i32 = arith.constant 16 : i32
    %171 = arith.muli %arg0, %c16_i32 : i32
    %172 = vector.broadcast %171 : i32 to vector<16x16xi32>
    %173 = arith.addi %170, %172 : vector<16x16xi32>
    %c24_i32 = arith.constant 24 : i32
    %174 = vector.broadcast %c24_i32 : i32 to vector<16x16xi32>
    %175 = arith.cmpi slt, %173, %174 : vector<16x16xi32>
    %cst_72 = arith.constant 0.000000e+00 : f32
    %176 = vector.broadcast %cst_72 : f32 to vector<16x16xf32>
    %177 = arith.select %175, %169, %176 : vector<16x16xi1>, vector<16x16xf32>
    %178 = vector.extract_strided_slice %177 {offsets = [0, 0], sizes = [8, 16], strides = [1, 1]} : vector<16x16xf32> to vector<8x16xf32>
    %179 = vector.extract_strided_slice %177 {offsets = [8, 0], sizes = [8, 16], strides = [1, 1]} : vector<16x16xf32> to vector<8x16xf32>
    %180 = arith.addf %178, %179 : vector<8x16xf32>
    %c0_73 = arith.constant 0 : index
    %c0_74 = arith.constant 0 : index
    %181 = vector.load %arg17[%c0_73, %c0_74] : memref<8x16xf32, #tpu.memory_space<vmem>>, vector<8x16xf32>
    tpu.vector_store %arg17[%c0_73, %c0_74], %180 {strides = array<i32>} : memref<8x16xf32, #tpu.memory_space<vmem>>, vector<8x16xf32>,
    return
  }
  func.func @transform_0(%arg0: i32) -> (i32, i32) {
    %c0_i32 = arith.constant 0 : i32
    %c0_i32_0 = arith.constant 0 : i32
    return %arg0, %c0_i32 : i32, i32
  }
  func.func @transform_1(%arg0: i32) -> (i32, i32) {
    %c0_i32 = arith.constant 0 : i32
    %c0_i32_0 = arith.constant 0 : i32
    return %arg0, %c0_i32 : i32, i32
  }
  func.func @transform_2(%arg0: i32) -> (i32, i32) {
    %c0_i32 = arith.constant 0 : i32
    %c0_i32_0 = arith.constant 0 : i32
    return %arg0, %c0_i32 : i32, i32
  }
  func.func @transform_3(%arg0: i32) -> (i32, i32) {
    %c0_i32 = arith.constant 0 : i32
    %c0_i32_0 = arith.constant 0 : i32
    %c0_i32_1 = arith.constant 0 : i32
    return %c0_i32, %c0_i32_0 : i32, i32
  }
  func.func @transform_4(%arg0: i32) -> (i32, i32) {
    %c0_i32 = arith.constant 0 : i32
    %c0_i32_0 = arith.constant 0 : i32
    %c0_i32_1 = arith.constant 0 : i32
    return %c0_i32, %c0_i32_0 : i32, i32
  }
  func.func @transform_5(%arg0: i32) -> (i32, i32) {
    %c0_i32 = arith.constant 0 : i32
    %c0_i32_0 = arith.constant 0 : i32
    %c0_i32_1 = arith.constant 0 : i32
    return %c0_i32, %c0_i32_0 : i32, i32
  }
  func.func @transform_6(%arg0: i32) -> (i32, i32) {
    %c0_i32 = arith.constant 0 : i32
    %c0_i32_0 = arith.constant 0 : i32
    %c0_i32_1 = arith.constant 0 : i32
    return %c0_i32, %c0_i32_0 : i32, i32
  }
  func.func @transform_7(%arg0: i32) -> (i32, i32) {
    %c0_i32 = arith.constant 0 : i32
    %c0_i32_0 = arith.constant 0 : i32
    %c0_i32_1 = arith.constant 0 : i32
    return %c0_i32, %c0_i32_0 : i32, i32
  }
  func.func @transform_8(%arg0: i32) -> (i32, i32) {
    %c0_i32 = arith.constant 0 : i32
    %c0_i32_0 = arith.constant 0 : i32
    %c0_i32_1 = arith.constant 0 : i32
    return %c0_i32, %c0_i32_0 : i32, i32
  }
  func.func @transform_9(%arg0: i32) -> (i32, i32, i32) {
    %c0_i32 = arith.constant 0 : i32
    %c0_i32_0 = arith.constant 0 : i32
    %c0_i32_1 = arith.constant 0 : i32
    %c0_i32_2 = arith.constant 0 : i32
    return %c0_i32, %c0_i32_0, %c0_i32_1 : i32, i32, i32
  }
  func.func @transform_10(%arg0: i32) -> (i32, i32) {
    %c0_i32 = arith.constant 0 : i32
    %c0_i32_0 = arith.constant 0 : i32
    %c0_i32_1 = arith.constant 0 : i32
    return %c0_i32, %c0_i32_0 : i32, i32
  }
  func.func @transform_11(%arg0: i32) -> (i32, i32, i32) {
    %c0_i32 = arith.constant 0 : i32
    %c0_i32_0 = arith.constant 0 : i32
    %c0_i32_1 = arith.constant 0 : i32
    %c0_i32_2 = arith.constant 0 : i32
    return %c0_i32, %c0_i32_0, %c0_i32_1 : i32, i32, i32
  }
  func.func @transform_12(%arg0: i32) -> (i32, i32) {
    %c0_i32 = arith.constant 0 : i32
    %c0_i32_0 = arith.constant 0 : i32
    %c0_i32_1 = arith.constant 0 : i32
    return %c0_i32, %c0_i32_0 : i32, i32
  }
  func.func @transform_13(%arg0: i32) -> (i32, i32) {
    %c0_i32 = arith.constant 0 : i32
    %c0_i32_0 = arith.constant 0 : i32
    %c0_i32_1 = arith.constant 0 : i32
    return %c0_i32, %c0_i32_0 : i32, i32
  }
  func.func @transform_14(%arg0: i32) -> (i32, i32) {
    %c0_i32 = arith.constant 0 : i32
    %c0_i32_0 = arith.constant 0 : i32
    %c0_i32_1 = arith.constant 0 : i32
    return %c0_i32, %c0_i32_0 : i32, i32
  }
  func.func @transform_15(%arg0: i32) -> (i32, i32) {
    %c0_i32 = arith.constant 0 : i32
    %c0_i32_0 = arith.constant 0 : i32
    return %arg0, %c0_i32 : i32, i32
  }
  func.func @transform_16(%arg0: i32) -> (i32, i32) {
    %c0_i32 = arith.constant 0 : i32
    %c0_i32_0 = arith.constant 0 : i32
    return %arg0, %c0_i32 : i32, i32
  }
}

</mosaic_0001>

<llo_original>
// kernel: sub.3
$region0: #{sub.3}
  #allocation0 [shape = 's32[1]{0}', space=sflag, size = 0x4, scoped, tag = 'scoped memory for sub.3']
  %s0 = inlined_call_operand.vmem [shape: f32[24,16], index: 0, kind: input, shape index: {}]
  %s1 = inlined_call_operand.vmem [shape: f32[24,16], index: 1, kind: input, shape index: {}]
  %s2 = inlined_call_operand.vmem [shape: f32[24,16], index: 2, kind: output, shape index: {}]
  %v3 = vld [vmem:[%s0] sm:$0xff]
  %v4 = vld [vmem:[%s1] sm:$0xff]
  %5 = xla_tuple %v3, %v4
  %6 = xla_tuple %5
  %v7 = vsub.f32 %v3, %v4
  %8 = xla_tuple %v7
  %9 = vst [vmem:[%s2] sm:$0xff] %v7
  %s10 = scalar_lea.vmem %s0, 8
  %v11 = vld [vmem:[%s10] sm:$0xff]
  %s12 = scalar_lea.vmem %s1, 8
  %v13 = vld [vmem:[%s12] sm:$0xff]
  %14 = xla_tuple %v11, %v13
  %15 = xla_tuple %14
  %v16 = vsub.f32 %v11, %v13
  %17 = xla_tuple %v16
  %s18 = scalar_lea.vmem %s2, 8
  %19 = vst [vmem:[%s18] sm:$0xff] %v16

// kernel: flow_loss_forward.1
$region0: #{flow_loss_forward.1}
  #allocation0 [shape = 'u32[]', space=smem, size = 0x4, offset = 0x4, fixed_abs, tag = 'smem constant byte address 0x4 - core index']
  #allocation1 [shape = 'u32[144,128]{1,0:T(1,128)}', space=vmem, size = 0x12000, scoped, tag = 'internal scratch']
  %s0 = inlined_call_operand.vmem [shape: bf16[32,16], index: 0, kind: input, shape index: {}]
  %s1 = inlined_call_operand.vmem [shape: bf16[32,128], index: 1, kind: input, shape index: {}]
  %s2 = inlined_call_operand.vmem [shape: f32[32,16], index: 2, kind: input, shape index: {}]
  %s3 = inlined_call_operand.vmem [shape: bf16[16,128], index: 3, kind: input, shape index: {}]
  %s4 = inlined_call_operand.vmem [shape: f32[1,128], index: 4, kind: input, shape index: {}]
  %s5 = inlined_call_operand.vmem [shape: bf16[128,1024], index: 5, kind: input, shape index: {}]
  %s6 = inlined_call_operand.vmem [shape: f32[1,1024], index: 6, kind: input, shape index: {}]
  %s7 = inlined_call_operand.vmem [shape: f32[2,128], index: 7, kind: input, shape index: {}]
  %s8 = inlined_call_operand.vmem [shape: f32[2,128], index: 8, kind: input, shape index: {}]
  %s9 = inlined_call_operand.vmem [shape: bf16[2,128,128], index: 9, kind: input, shape index: {}]
  %s10 = inlined_call_operand.vmem [shape: f32[2,128], index: 10, kind: input, shape index: {}]
  %s11 = inlined_call_operand.vmem [shape: bf16[2,128,128], index: 11, kind: input, shape index: {}]
  %s12 = inlined_call_operand.vmem [shape: f32[2,128], index: 12, kind: input, shape index: {}]
  %s13 = inlined_call_operand.vmem [shape: bf16[128,128], index: 13, kind: input, shape index: {}]
  %s14 = inlined_call_operand.vmem [shape: f32[1,128], index: 14, kind: input, shape index: {}]
  %s15 = inlined_call_operand.vmem [shape: bf16[32,128], index: 15, kind: output, shape index: {0}]
  %s16 = inlined_call_operand.vmem [shape: f32[16,16], index: 16, kind: output, shape index: {1}]
  %17 = xla_tuple %s15, %s16
  %s18 = sld [smem:[#allocation0]]
  $region101: #{flow_loss_forward.1} parent=0
    _
  %s20 = ssub.s32 1, %s18
  %s21 = scalar_select 0, %s20, %s18
  loop: start=0, step=1, limit=4
  $region2: #{flow_loss_forward.1} parent=0 // loop_pre_header
    _
  $region3: #{flow_loss_forward.1} parent=0 // loop_header
    %s23 = sphi 0, %s27
    %p24 = scmp.ge.s32.totalorder %s23, 4
    %s33 = sphi 0, %s35
    %s36 = sphi 0, %s33
    %s37 = sphi 0, %s36
    %s53 = sphi 0, %s37
    %s59 = sphi 0, %s61
    %s62 = sphi 0, %s59
    %s63 = sphi 0, %s62
    %s79 = sphi 0, %s63
    %s85 = sphi 0, %s87
    %s88 = sphi 0, %s85
    %s89 = sphi 0, %s88
    %s105 = sphi 0, %s89
    %s109 = sphi 0, %s109
    %s111 = sphi 0, %s109
    %s112 = sphi 0, %s111
    %s126 = sphi 0, %s112
    %s130 = sphi 0, %s130
    %s132 = sphi 0, %s130
    %s133 = sphi 0, %s132
    %s147 = sphi 0, %s133
    %s151 = sphi 0, %s151
    %s153 = sphi 0, %s151
    %s154 = sphi 0, %s153
    %s168 = sphi 0, %s154
    %s172 = sphi 0, %s172
    %s174 = sphi 0, %s172
    %s175 = sphi 0, %s174
    %s189 = sphi 0, %s175
    %s193 = sphi 0, %s193
    %s195 = sphi 0, %s193
    %s196 = sphi 0, %s195
    %s210 = sphi 0, %s196
    %s214 = sphi 0, %s214
    %s216 = sphi 0, %s214
    %s217 = sphi 0, %s216
    %s231 = sphi 0, %s217
    %s235 = sphi 0, %s235
    %s237 = sphi 0, %s235
    %s238 = sphi 0, %s237
    %s252 = sphi 0, %s238
    %s256 = sphi 0, %s256
    %s258 = sphi 0, %s256
    %s259 = sphi 0, %s258
    %s273 = sphi 0, %s259
    %s277 = sphi 0, %s277
    %s279 = sphi 0, %s277
    %s280 = sphi 0, %s279
    %s294 = sphi 0, %s280
    %s298 = sphi 0, %s298
    %s300 = sphi 0, %s298
    %s301 = sphi 0, %s300
    %s315 = sphi 0, %s301
    %s319 = sphi 0, %s319
    %s321 = sphi 0, %s319
    %s322 = sphi 0, %s321
    %s336 = sphi 0, %s322
    %s340 = sphi 0, %s340
    %s342 = sphi 0, %s340
    %s343 = sphi 0, %s342
    %s357 = sphi 0, %s343
    %s363 = sphi 0, %s365
    %s366 = sphi 0, %s363
    %s367 = sphi 0, %s366
    %s383 = sphi 0, %s367
    %s389 = sphi 0, %s391
    %s392 = sphi 0, %s389
    %s393 = sphi 0, %s392
    %s409 = sphi 0, %s393
  $region4: #{flow_loss_forward.1} parent=0 // loop_header_branch
    %26 = sbr.rel (%p24) target = $region8
  $region5: #{flow_loss_forward.1} parent=0 // loop_body
    %s28 = ssub.s32 %s23, 1
    %s29 = ssub.s32 %s23, 2
    %s30 = sadd.s32 %s23, 1
    %s31 = ssub.s32 %s23, %s30
    %p32 = scmp.eq.s32.totalorder %s31, 0
    %s34 = sadd.s32 %s33, 1
    %s35 = scalar_select %p32, %s33, %s34
    %p38 = pneg %p32
    %p39 = scmp.eq.s32.totalorder %s23, 1
    %p40 = por %p38, %p39
    %p41 = scmp.ne.s32.totalorder %s33, %s36
    %p42 = scmp.eq.s32.totalorder %s23, 0
    %p43 = por %p41, %p42
    %p44 = scmp.ne.s32.totalorder %s33, %s36
    %p45 = scmp.eq.s32.totalorder %s28, 1
    %p46 = por %p44, %p45
    %p47 = scmp.ne.s32.totalorder %s36, %s37
    %p48 = scmp.eq.s32.totalorder %s28, 0
    %p49 = por %p47, %p48
    %p50 = scmp.ne.s32.totalorder %s36, %s37
    %p51 = scmp.eq.s32.totalorder %s29, 1
    %p52 = por %p50, %p51
    %p54 = scmp.ne.s32.totalorder %s37, %s53
    %p55 = scmp.eq.s32.totalorder %s29, 0
    %p56 = por %p54, %p55
    %s57 = ssub.s32 %s23, %s30
    %p58 = scmp.eq.s32.totalorder %s57, 0
    %s60 = sadd.s32 %s59, 1
    %s61 = scalar_select %p58, %s59, %s60
    %p64 = pneg %p58
    %p65 = scmp.eq.s32.totalorder %s23, 1
    %p66 = por %p64, %p65
    %p67 = scmp.ne.s32.totalorder %s59, %s62
    %p68 = scmp.eq.s32.totalorder %s23, 0
    %p69 = por %p67, %p68
    %p70 = scmp.ne.s32.totalorder %s59, %s62
    %p71 = scmp.eq.s32.totalorder %s28, 1
    %p72 = por %p70, %p71
    %p73 = scmp.ne.s32.totalorder %s62, %s63
    %p74 = scmp.eq.s32.totalorder %s28, 0
    %p75 = por %p73, %p74
    %p76 = scmp.ne.s32.totalorder %s62, %s63
    %p77 = scmp.eq.s32.totalorder %s29, 1
    %p78 = por %p76, %p77
    %p80 = scmp.ne.s32.totalorder %s63, %s79
    %p81 = scmp.eq.s32.totalorder %s29, 0
    %p82 = por %p80, %p81
    %s83 = ssub.s32 %s23, %s30
    %p84 = scmp.eq.s32.totalorder %s83, 0
    %s86 = sadd.s32 %s85, 1
    %s87 = scalar_select %p84, %s85, %s86
    %p90 = pneg %p84
    %p91 = scmp.eq.s32.totalorder %s23, 1
    %p92 = por %p90, %p91
    %p93 = scmp.ne.s32.totalorder %s85, %s88
    %p94 = scmp.eq.s32.totalorder %s23, 0
    %p95 = por %p93, %p94
    %p96 = scmp.ne.s32.totalorder %s85, %s88
    %p97 = scmp.eq.s32.totalorder %s28, 1
    %p98 = por %p96, %p97
    %p99 = scmp.ne.s32.totalorder %s88, %s89
    %p100 = scmp.eq.s32.totalorder %s28, 0
    %p101 = por %p99, %p100
    %p102 = scmp.ne.s32.totalorder %s88, %s89
    %p103 = scmp.eq.s32.totalorder %s29, 1
    %p104 = por %p102, %p103
    %p106 = scmp.ne.s32.totalorder %s89, %s105
    %p107 = scmp.eq.s32.totalorder %s29, 0
    %p108 = por %p106, %p107
    %s110 = sadd.s32 %s109, 1
    %p113 = scmp.eq.s32.totalorder %s23, 1
    %p114 = scmp.ne.s32.totalorder %s109, %s111
    %p115 = scmp.eq.s32.totalorder %s23, 0
    %p116 = por %p114, %p115
    %p117 = scmp.ne.s32.totalorder %s109, %s111
    %p118 = scmp.eq.s32.totalorder %s28, 1
    %p119 = por %p117, %p118
    %p120 = scmp.ne.s32.totalorder %s111, %s112
    %p121 = scmp.eq.s32.totalorder %s28, 0
    %p122 = por %p120, %p121
    %p123 = scmp.ne.s32.totalorder %s111, %s112
    %p124 = scmp.eq.s32.totalorder %s29, 1
    %p125 = por %p123, %p124
    %p127 = scmp.ne.s32.totalorder %s112, %s126
    %p128 = scmp.eq.s32.totalorder %s29, 0
    %p129 = por %p127, %p128
    %s131 = sadd.s32 %s130, 1
    %p134 = scmp.eq.s32.totalorder %s23, 1
    %p135 = scmp.ne.s32.totalorder %s130, %s132
    %p136 = scmp.eq.s32.totalorder %s23, 0
    %p137 = por %p135, %p136
    %p138 = scmp.ne.s32.totalorder %s130, %s132
    %p139 = scmp.eq.s32.totalorder %s28, 1
    %p140 = por %p138, %p139
    %p141 = scmp.ne.s32.totalorder %s132, %s133
    %p142 = scmp.eq.s32.totalorder %s28, 0
    %p143 = por %p141, %p142
    %p144 = scmp.ne.s32.totalorder %s132, %s133
    %p145 = scmp.eq.s32.totalorder %s29, 1
    %p146 = por %p144, %p145
    %p148 = scmp.ne.s32.totalorder %s133, %s147
    %p149 = scmp.eq.s32.totalorder %s29, 0
    %p150 = por %p148, %p149
    %s152 = sadd.s32 %s151, 1
    %p155 = scmp.eq.s32.totalorder %s23, 1
    %p156 = scmp.ne.s32.totalorder %s151, %s153
    %p157 = scmp.eq.s32.totalorder %s23, 0
    %p158 = por %p156, %p157
    %p159 = scmp.ne.s32.totalorder %s151, %s153
    %p160 = scmp.eq.s32.totalorder %s28, 1
    %p161 = por %p159, %p160
    %p162 = scmp.ne.s32.totalorder %s153, %s154
    %p163 = scmp.eq.s32.totalorder %s28, 0
    %p164 = por %p162, %p163
    %p165 = scmp.ne.s32.totalorder %s153, %s154
    %p166 = scmp.eq.s32.totalorder %s29, 1
    %p167 = por %p165, %p166
    %p169 = scmp.ne.s32.totalorder %s154, %s168
    %p170 = scmp.eq.s32.totalorder %s29, 0
    %p171 = por %p169, %p170
    %s173 = sadd.s32 %s172, 1
    %p176 = scmp.eq.s32.totalorder %s23, 1
    %p177 = scmp.ne.s32.totalorder %s172, %s174
    %p178 = scmp.eq.s32.totalorder %s23, 0
    %p179 = por %p177, %p178
    %p180 = scmp.ne.s32.totalorder %s172, %s174
    %p181 = scmp.eq.s32.totalorder %s28, 1
    %p182 = por %p180, %p181
    %p183 = scmp.ne.s32.totalorder %s174, %s175
    %p184 = scmp.eq.s32.totalorder %s28, 0
    %p185 = por %p183, %p184
    %p186 = scmp.ne.s32.totalorder %s174, %s175
    %p187 = scmp.eq.s32.totalorder %s29, 1
    %p188 = por %p186, %p187
    %p190 = scmp.ne.s32.totalorder %s175, %s189
    %p191 = scmp.eq.s32.totalorder %s29, 0
    %p192 = por %p190, %p191
    %s194 = sadd.s32 %s193, 1
    %p197 = scmp.eq.s32.totalorder %s23, 1
    %p198 = scmp.ne.s32.totalorder %s193, %s195
    %p199 = scmp.eq.s32.totalorder %s23, 0
    %p200 = por %p198, %p199
    %p201 = scmp.ne.s32.totalorder %s193, %s195
    %p202 = scmp.eq.s32.totalorder %s28, 1
    %p203 = por %p201, %p202
    %p204 = scmp.ne.s32.totalorder %s195, %s196
    %p205 = scmp.eq.s32.totalorder %s28, 0
    %p206 = por %p204, %p205
    %p207 = scmp.ne.s32.totalorder %s195, %s196
    %p208 = scmp.eq.s32.totalorder %s29, 1
    %p209 = por %p207, %p208
    %p211 = scmp.ne.s32.totalorder %s196, %s210
    %p212 = scmp.eq.s32.totalorder %s29, 0
    %p213 = por %p211, %p212
    %s215 = sadd.s32 %s214, 1
    %p218 = scmp.eq.s32.totalorder %s23, 1
    %p219 = scmp.ne.s32.totalorder %s214, %s216
    %p220 = scmp.eq.s32.totalorder %s23, 0
    %p221 = por %p219, %p220
    %p222 = scmp.ne.s32.totalorder %s214, %s216
    %p223 = scmp.eq.s32.totalorder %s28, 1
    %p224 = por %p222, %p223
    %p225 = scmp.ne.s32.totalorder %s216, %s217
    %p226 = scmp.eq.s32.totalorder %s28, 0
    %p227 = por %p225, %p226
    %p228 = scmp.ne.s32.totalorder %s216, %s217
    %p229 = scmp.eq.s32.totalorder %s29, 1
    %p230 = por %p228, %p229
    %p232 = scmp.ne.s32.totalorder %s217, %s231
    %p233 = scmp.eq.s32.totalorder %s29, 0
    %p234 = por %p232, %p233
    %s236 = sadd.s32 %s235, 1
    %p239 = scmp.eq.s32.totalorder %s23, 1
    %p240 = scmp.ne.s32.totalorder %s235, %s237
    %p241 = scmp.eq.s32.totalorder %s23, 0
    %p242 = por %p240, %p241
    %p243 = scmp.ne.s32.totalorder %s235, %s237
    %p244 = scmp.eq.s32.totalorder %s28, 1
    %p245 = por %p243, %p244
    %p246 = scmp.ne.s32.totalorder %s237, %s238
    %p247 = scmp.eq.s32.totalorder %s28, 0
    %p248 = por %p246, %p247
    %p249 = scmp.ne.s32.totalorder %s237, %s238
    %p250 = scmp.eq.s32.totalorder %s29, 1
    %p251 = por %p249, %p250
    %p253 = scmp.ne.s32.totalorder %s238, %s252
    %p254 = scmp.eq.s32.totalorder %s29, 0
    %p255 = por %p253, %p254
    %s257 = sadd.s32 %s256, 1
    %p260 = scmp.eq.s32.totalorder %s23, 1
    %p261 = scmp.ne.s32.totalorder %s256, %s258
    %p262 = scmp.eq.s32.totalorder %s23, 0
    %p263 = por %p261, %p262
    %p264 = scmp.ne.s32.totalorder %s256, %s258
    %p265 = scmp.eq.s32.totalorder %s28, 1
    %p266 = por %p264, %p265
    %p267 = scmp.ne.s32.totalorder %s258, %s259
    %p268 = scmp.eq.s32.totalorder %s28, 0
    %p269 = por %p267, %p268
    %p270 = scmp.ne.s32.totalorder %s258, %s259
    %p271 = scmp.eq.s32.totalorder %s29, 1
    %p272 = por %p270, %p271
    %p274 = scmp.ne.s32.totalorder %s259, %s273
    %p275 = scmp.eq.s32.totalorder %s29, 0
    %p276 = por %p274, %p275
    %s278 = sadd.s32 %s277, 1
    %p281 = scmp.eq.s32.totalorder %s23, 1
    %p282 = scmp.ne.s32.totalorder %s277, %s279
    %p283 = scmp.eq.s32.totalorder %s23, 0
    %p284 = por %p282, %p283
    %p285 = scmp.ne.s32.totalorder %s277, %s279
    %p286 = scmp.eq.s32.totalorder %s28, 1
    %p287 = por %p285, %p286
    %p288 = scmp.ne.s32.totalorder %s279, %s280
    %p289 = scmp.eq.s32.totalorder %s28, 0
    %p290 = por %p288, %p289
    %p291 = scmp.ne.s32.totalorder %s279, %s280
    %p292 = scmp.eq.s32.totalorder %s29, 1
    %p293 = por %p291, %p292
    %p295 = scmp.ne.s32.totalorder %s280, %s294
    %p296 = scmp.eq.s32.totalorder %s29, 0
    %p297 = por %p295, %p296
    %s299 = sadd.s32 %s298, 1
    %p302 = scmp.eq.s32.totalorder %s23, 1
    %p303 = scmp.ne.s32.totalorder %s298, %s300
    %p304 = scmp.eq.s32.totalorder %s23, 0
    %p305 = por %p303, %p304
    %p306 = scmp.ne.s32.totalorder %s298, %s300
    %p307 = scmp.eq.s32.totalorder %s28, 1
    %p308 = por %p306, %p307
    %p309 = scmp.ne.s32.totalorder %s300, %s301
    %p310 = scmp.eq.s32.totalorder %s28, 0
    %p311 = por %p309, %p310
    %p312 = scmp.ne.s32.totalorder %s300, %s301
    %p313 = scmp.eq.s32.totalorder %s29, 1
    %p314 = por %p312, %p313
    %p316 = scmp.ne.s32.totalorder %s301, %s315
    %p317 = scmp.eq.s32.totalorder %s29, 0
    %p318 = por %p316, %p317
    %s320 = sadd.s32 %s319, 1
    %p323 = scmp.eq.s32.totalorder %s23, 1
    %p324 = scmp.ne.s32.totalorder %s319, %s321
    %p325 = scmp.eq.s32.totalorder %s23, 0
    %p326 = por %p324, %p325
    %p327 = scmp.ne.s32.totalorder %s319, %s321
    %p328 = scmp.eq.s32.totalorder %s28, 1
    %p329 = por %p327, %p328
    %p330 = scmp.ne.s32.totalorder %s321, %s322
    %p331 = scmp.eq.s32.totalorder %s28, 0
    %p332 = por %p330, %p331
    %p333 = scmp.ne.s32.totalorder %s321, %s322
    %p334 = scmp.eq.s32.totalorder %s29, 1
    %p335 = por %p333, %p334
    %p337 = scmp.ne.s32.totalorder %s322, %s336
    %p338 = scmp.eq.s32.totalorder %s29, 0
    %p339 = por %p337, %p338
    %s341 = sadd.s32 %s340, 1
    %p344 = scmp.eq.s32.totalorder %s23, 1
    %p345 = scmp.ne.s32.totalorder %s340, %s342
    %p346 = scmp.eq.s32.totalorder %s23, 0
    %p347 = por %p345, %p346
    %p348 = scmp.ne.s32.totalorder %s340, %s342
    %p349 = scmp.eq.s32.totalorder %s28, 1
    %p350 = por %p348, %p349
    %p351 = scmp.ne.s32.totalorder %s342, %s343
    %p352 = scmp.eq.s32.totalorder %s28, 0
    %p353 = por %p351, %p352
    %p354 = scmp.ne.s32.totalorder %s342, %s343
    %p355 = scmp.eq.s32.totalorder %s29, 1
    %p356 = por %p354, %p355
    %p358 = scmp.ne.s32.totalorder %s343, %s357
    %p359 = scmp.eq.s32.totalorder %s29, 0
    %p360 = por %p358, %p359
    %s361 = ssub.s32 %s23, %s30
    %p362 = scmp.eq.s32.totalorder %s361, 0
    %s364 = sadd.s32 %s363, 1
    %s365 = scalar_select %p362, %s363, %s364
    %p368 = pneg %p362
    %p369 = scmp.eq.s32.totalorder %s23, 1
    %p370 = por %p368, %p369
    %p371 = scmp.ne.s32.totalorder %s363, %s366
    %p372 = scmp.eq.s32.totalorder %s23, 0
    %p373 = por %p371, %p372
    %p374 = scmp.ne.s32.totalorder %s363, %s366
    %p375 = scmp.eq.s32.totalorder %s28, 1
    %p376 = por %p374, %p375
    %p377 = scmp.ne.s32.totalorder %s366, %s367
    %p378 = scmp.eq.s32.totalorder %s28, 0
    %p379 = por %p377, %p378
    %p380 = scmp.ne.s32.totalorder %s366, %s367
    %p381 = scmp.eq.s32.totalorder %s29, 1
    %p382 = por %p380, %p381
    %p384 = scmp.ne.s32.totalorder %s367, %s383
    %p385 = scmp.eq.s32.totalorder %s29, 0
    %p386 = por %p384, %p385
    %s387 = ssub.s32 %s23, %s30
    %p388 = scmp.eq.s32.totalorder %s387, 0
    %s390 = sadd.s32 %s389, 1
    %s391 = scalar_select %p388, %s389, %s390
    %p394 = pneg %p388
    %p395 = scmp.eq.s32.totalorder %s23, 1
    %p396 = por %p394, %p395
    %p397 = scmp.ne.s32.totalorder %s389, %s392
    %p398 = scmp.eq.s32.totalorder %s23, 0
    %p399 = por %p397, %p398
    %p400 = scmp.ne.s32.totalorder %s389, %s392
    %p401 = scmp.eq.s32.totalorder %s28, 1
    %p402 = por %p400, %p401
    %p403 = scmp.ne.s32.totalorder %s392, %s393
    %p404 = scmp.eq.s32.totalorder %s28, 0
    %p405 = por %p403, %p404
    %p406 = scmp.ne.s32.totalorder %s392, %s393
    %p407 = scmp.eq.s32.totalorder %s29, 1
    %p408 = por %p406, %p407
    %p410 = scmp.ne.s32.totalorder %s393, %s409
    %p411 = scmp.eq.s32.totalorder %s29, 0
    %p412 = por %p410, %p411
    %p413 = scmp.le.s32.totalorder 1, %s23
    %p414 = scmp.lt.s32.totalorder %s23, 3
    %p415 = pnand %p413, %p414
    %p416 = pneg %p415
    // Predicated region
    $region9: #{flow_loss_forward.1} parent=5 // pred_check
      _
    $region10: #{flow_loss_forward.1} parent=5 // pred_check_branch
      %418 = sbr.rel (%p415) target = $region12
    $region11: #{flow_loss_forward.1} parent=5 // pred_region
      %s419 = ssub.s32 %s23, 1
      // Predicated region
      $region13: #{flow_loss_forward.1} parent=11 // pred_check
        %p420 = pneg %p122
      $region14: #{flow_loss_forward.1} parent=11 // pred_check_branch
        %422 = sbr.rel (%p420) target = $region16
      $region15: #{flow_loss_forward.1} parent=11 // pred_region
        _
      $region16: #{flow_loss_forward.1} parent=11 // pred_fallthru
        _
      // Predicated region
      $region17: #{flow_loss_forward.1} parent=11 // pred_check
        %p423 = pneg %p143
      $region18: #{flow_loss_forward.1} parent=11 // pred_check_branch
        %425 = sbr.rel (%p423) target = $region20
      $region19: #{flow_loss_forward.1} parent=11 // pred_region
        _
      $region20: #{flow_loss_forward.1} parent=11 // pred_fallthru
        _
      // Predicated region
      $region21: #{flow_loss_forward.1} parent=11 // pred_check
        %p426 = pneg %p164
      $region22: #{flow_loss_forward.1} parent=11 // pred_check_branch
        %428 = sbr.rel (%p426) target = $region24
      $region23: #{flow_loss_forward.1} parent=11 // pred_region
        _
      $region24: #{flow_loss_forward.1} parent=11 // pred_fallthru
        _
      // Predicated region
      $region25: #{flow_loss_forward.1} parent=11 // pred_check
        %p429 = pneg %p185
      $region26: #{flow_loss_forward.1} parent=11 // pred_check_branch
        %431 = sbr.rel (%p429) target = $region28
      $region27: #{flow_loss_forward.1} parent=11 // pred_region
        _
      $region28: #{flow_loss_forward.1} parent=11 // pred_fallthru
        _
      // Predicated region
      $region29: #{flow_loss_forward.1} parent=11 // pred_check
        %p432 = pneg %p206
      $region30: #{flow_loss_forward.1} parent=11 // pred_check_branch
        %434 = sbr.rel (%p432) target = $region32
      $region31: #{flow_loss_forward.1} parent=11 // pred_region
        _
      $region32: #{flow_loss_forward.1} parent=11 // pred_fallthru
        _
      // Predicated region
      $region33: #{flow_loss_forward.1} parent=11 // pred_check
        %p435 = pneg %p227
      $region34: #{flow_loss_forward.1} parent=11 // pred_check_branch
        %437 = sbr.rel (%p435) target = $region36
      $region35: #{flow_loss_forward.1} parent=11 // pred_region
        _
      $region36: #{flow_loss_forward.1} parent=11 // pred_fallthru
        _
      // Predicated region
      $region37: #{flow_loss_forward.1} parent=11 // pred_check
        %p438 = pneg %p248
      $region38: #{flow_loss_forward.1} parent=11 // pred_check_branch
        %440 = sbr.rel (%p438) target = $region40
      $region39: #{flow_loss_forward.1} parent=11 // pred_region
        _
      $region40: #{flow_loss_forward.1} parent=11 // pred_fallthru
        _
      // Predicated region
      $region41: #{flow_loss_forward.1} parent=11 // pred_check
        %p441 = pneg %p269
      $region42: #{flow_loss_forward.1} parent=11 // pred_check_branch
        %443 = sbr.rel (%p441) target = $region44
      $region43: #{flow_loss_forward.1} parent=11 // pred_region
        _
      $region44: #{flow_loss_forward.1} parent=11 // pred_fallthru
        _
      // Predicated region
      $region45: #{flow_loss_forward.1} parent=11 // pred_check
        %p444 = pneg %p290
      $region46: #{flow_loss_forward.1} parent=11 // pred_check_branch
        %446 = sbr.rel (%p444) target = $region48
      $region47: #{flow_loss_forward.1} parent=11 // pred_region
        _
      $region48: #{flow_loss_forward.1} parent=11 // pred_fallthru
        _
      // Predicated region
      $region49: #{flow_loss_forward.1} parent=11 // pred_check
        %p447 = pneg %p311
      $region50: #{flow_loss_forward.1} parent=11 // pred_check_branch
        %449 = sbr.rel (%p447) target = $region52
      $region51: #{flow_loss_forward.1} parent=11 // pred_region
        _
      $region52: #{flow_loss_forward.1} parent=11 // pred_fallthru
        _
      // Predicated region
      $region53: #{flow_loss_forward.1} parent=11 // pred_check
        %p450 = pneg %p332
      $region54: #{flow_loss_forward.1} parent=11 // pred_check_branch
        %452 = sbr.rel (%p450) target = $region56
      $region55: #{flow_loss_forward.1} parent=11 // pred_region
        _
      $region56: #{flow_loss_forward.1} parent=11 // pred_fallthru
        _
      // Predicated region
      $region57: #{flow_loss_forward.1} parent=11 // pred_check
        %p453 = pneg %p353
      $region58: #{flow_loss_forward.1} parent=11 // pred_check_branch
        %455 = sbr.rel (%p453) target = $region60
      $region59: #{flow_loss_forward.1} parent=11 // pred_region
        _
      $region60: #{flow_loss_forward.1} parent=11 // pred_fallthru
        _
    $region12: #{flow_loss_forward.1} parent=5 // pred_fallthru
      _
    %p456 = scmp.lt.s32.totalorder %s23, 2
    // Predicated region
    $region61: #{flow_loss_forward.1} parent=5 // pred_check
      %p457 = pneg %p456
    $region62: #{flow_loss_forward.1} parent=5 // pred_check_branch
      %459 = sbr.rel (%p457) target = $region64
    $region63: #{flow_loss_forward.1} parent=5 // pred_region
      // Predicated region
      $region65: #{flow_loss_forward.1} parent=63 // pred_check
        %p460 = pneg %p43
      $region66: #{flow_loss_forward.1} parent=63 // pred_check_branch
        %462 = sbr.rel (%p460) target = $region68
      $region67: #{flow_loss_forward.1} parent=63 // pred_region
        %s463 = smul.u32 2, %s23
        %p464 = scmp.lt.s32.totalorder %s463, 3
        %s465 = scalar_select %p464, %s463, 3
        %s466 = smul.addr %s465, 4
        %s467 = scalar_lea.vmem %s0, %s466
        %s468 = smul.u32 2, %s23
      $region68: #{flow_loss_forward.1} parent=63 // pred_fallthru
        _
      // Predicated region
      $region69: #{flow_loss_forward.1} parent=63 // pred_check
        %p469 = pneg %p69
      $region70: #{flow_loss_forward.1} parent=63 // pred_check_branch
        %471 = sbr.rel (%p469) target = $region72
      $region71: #{flow_loss_forward.1} parent=63 // pred_region
        %s472 = smul.u32 2, %s23
        %p473 = scmp.lt.s32.totalorder %s472, 3
        %s474 = scalar_select %p473, %s472, 3
        %s475 = smul.addr %s474, 4
        %s476 = scalar_lea.vmem %s1, %s475
        %s477 = smul.u32 2, %s23
      $region72: #{flow_loss_forward.1} parent=63 // pred_fallthru
        _
      // Predicated region
      $region73: #{flow_loss_forward.1} parent=63 // pred_check
        %p478 = pneg %p95
      $region74: #{flow_loss_forward.1} parent=63 // pred_check_branch
        %480 = sbr.rel (%p478) target = $region76
      $region75: #{flow_loss_forward.1} parent=63 // pred_region
        %s481 = smul.u32 2, %s23
        %p482 = scmp.lt.s32.totalorder %s481, 3
        %s483 = scalar_select %p482, %s481, 3
        %s484 = smul.addr %s483, 8
        %s485 = scalar_lea.vmem %s2, %s484
        %s486 = smul.u32 2, %s23
      $region76: #{flow_loss_forward.1} parent=63 // pred_fallthru
        _
    $region64: #{flow_loss_forward.1} parent=5 // pred_fallthru
      _
    %p487 = scmp.le.s32.totalorder 1, %s23
    %p488 = scmp.lt.s32.totalorder %s23, 3
    %p489 = pnand %p487, %p488
    %p490 = pneg %p489
    // Predicated region
    $region77: #{flow_loss_forward.1} parent=5 // pred_check
      _
    $region78: #{flow_loss_forward.1} parent=5 // pred_check_branch
      %492 = sbr.rel (%p489) target = $region80
    $region79: #{flow_loss_forward.1} parent=5 // pred_region
      %s493 = ssub.s32 %s23, 1
      %s494 = smul.u32 2, %s28
      %p495 = scmp.lt.s32.totalorder %s494, 3
      %s496 = scalar_select %p495, %s494, 3
      %s497 = smul.addr %s496, 4
      %s498 = scalar_lea.vmem %s0, %s497
      %p499 = pneg %p49
      %p500 = pneg %p46
      %s501 = smul.u32 2, %s28
      %p502 = scmp.lt.s32.totalorder %s501, 3
      %s503 = scalar_select %p502, %s501, 3
      %s504 = smul.addr %s503, 4
      %s505 = scalar_lea.vmem %s1, %s504
      %p506 = pneg %p75
      %p507 = pneg %p72
      %s508 = smul.u32 2, %s28
      %p509 = scmp.lt.s32.totalorder %s508, 3
      %s510 = scalar_select %p509, %s508, 3
      %s511 = smul.addr %s510, 8
      %s512 = scalar_lea.vmem %s2, %s511
      %p513 = pneg %p101
      %p514 = pneg %p98
      %p515 = pneg %p122
      %p516 = pneg %p119
      %p517 = pneg %p143
      %p518 = pneg %p140
      %p519 = pneg %p164
      %p520 = pneg %p161
      %p521 = pneg %p185
      %p522 = pneg %p182
      %p523 = pneg %p206
      %p524 = pneg %p203
      %p525 = pneg %p227
      %p526 = pneg %p224
      %p527 = pneg %p248
      %p528 = pneg %p245
      %p529 = pneg %p269
      %p530 = pneg %p266
      %p531 = pneg %p290
      %p532 = pneg %p287
      %p533 = pneg %p311
      %p534 = pneg %p308
      %p535 = pneg %p332
      %p536 = pneg %p329
      %p537 = pneg %p353
      %p538 = pneg %p350
      %p539 = pneg %p379
      %p540 = pneg %p376
      %s541 = smul.u32 2, %s28
      %p542 = scmp.lt.s32.totalorder %s541, 3
      %s543 = scalar_select %p542, %s541, 3
      %s544 = smul.addr %s543, 4
      %s545 = scalar_lea.vmem %s15, %s544
      %p546 = pneg %p405
      %p547 = pneg %p402
      %p548 = scmp.lt.s32.totalorder %s28, 1
      %s549 = scalar_select %p548, %s28, 1
      %s550 = smul.addr %s549, 8
      %s551 = scalar_lea.vmem %s16, %s550
      %s552 = smul.u32 2, %s28
      %p553 = scmp.lt.s32.totalorder %s552, 3
      %s554 = scalar_select %p553, %s552, 3
      %s555 = smul.addr %s554, 4
      %s556 = scalar_lea.vmem %s0, %s555
      %s557 = smul.u32 2, %s28
      %s558 = smul.u32 2, %s28
      %p559 = scmp.lt.s32.totalorder %s558, 3
      %s560 = scalar_select %p559, %s558, 3
      %s561 = smul.addr %s560, 4
      %s562 = scalar_lea.vmem %s1, %s561
      %s563 = smul.u32 2, %s28
      %s564 = smul.u32 2, %s28
      %p565 = scmp.lt.s32.totalorder %s564, 3
      %s566 = scalar_select %p565, %s564, 3
      %s567 = smul.addr %s566, 8
      %s568 = scalar_lea.vmem %s2, %s567
      %s569 = smul.u32 2, %s28
      %s570 = smul.u32 2, %s28
      %p571 = scmp.lt.s32.totalorder %s570, 3
      %s572 = scalar_select %p571, %s570, 3
      %s573 = smul.addr %s572, 4
      %s574 = scalar_lea.vmem %s15, %s573
      %s575 = smul.u32 2, %s28
      %p576 = scmp.lt.s32.totalorder %s28, 1
      %s577 = scalar_select %p576, %s28, 1
      %s578 = smul.addr %s577, 8
      %s579 = scalar_lea.vmem %s16, %s578
      %v581 = vld [vmem:[%s562] sm:$0xf]
      %v582 = vld [vmem:[%s562 + $0x4] sm:$0xf]
      %v583 = vld [vmem:[%s556] sm:$0xf]
      %v584 = vld [vmem:[%s556 + $0x4] sm:$0xf]
      %v585 = vld [vmem:[%s3] sm:$0xf]
      %v586 = vld [vmem:[%s3 + $0x4] sm:$0xf]
      %v587 = vld [vmem:[%s4] sm:$0x1]
      %v589 = vlaneseq
      %v590 = vshrl.u32 %v589, 7
      %v591 = vsub.s32 0, %v590
      %v592 = vrot.slane %v587, %v591
      %v596 = vunpack.c.l.b16 %v583
      %v597 = vunpack.c.l.b16 %v584
      %v598 = vpack.c.b16 %v597, %v596
      %v601 = vunpack.c.l.b16 %v585
      %v602 = vunpack.c.l.b16 %v586
      %v603 = vpack.c.b16 %v602, %v601
      %vm605 = vcmask 130048
      %v607 = vsel %vm605, %v598, 0
      %609 = vmatprep.subr.bf16.mxu0 0
      %610 = vmatpush1.bf16.msra.mxu0 %v603
      %611 = vmatprep.subr.bf16.mxu0 0
      %612 = vmatpush1.bf16.msra.mxu0 0
      %613 = vmatprep.subr.bf16.mxu0 0
      %614 = vmatpush1.bf16.msra.mxu0 0
      %615 = vmatprep.subr.bf16.mxu0 0
      %616 = vmatpush1.bf16.msra.mxu0 0
      %617 = vmatprep.subr.bf16.mxu0 0
      %618 = vmatpush1.bf16.msra.mxu0 0
      %619 = vmatprep.subr.bf16.mxu0 0
      %620 = vmatpush1.bf16.msra.mxu0 0
      %621 = vmatprep.subr.bf16.mxu0 0
      %622 = vmatpush1.bf16.msra.mxu0 0
      %623 = vmatprep.subr.bf16.mxu0 0
      %624 = vmatpush1.bf16.msra.mxu0 0
      %625 = vmatprep.subr.bf16.mxu0 0
      %626 = vmatpush1.bf16.msra.mxu0 0
      %627 = vmatprep.subr.bf16.mxu0 0
      %628 = vmatpush1.bf16.msra.mxu0 0
      %629 = vmatprep.subr.bf16.mxu0 0
      %630 = vmatpush1.bf16.msra.mxu0 0
      %631 = vmatprep.subr.bf16.mxu0 0
      %632 = vmatpush1.bf16.msra.mxu0 0
      %633 = vmatprep.subr.bf16.mxu0 0
      %634 = vmatpush1.bf16.msra.mxu0 0
      %635 = vmatprep.subr.bf16.mxu0 0
      %636 = vmatpush1.bf16.msra.mxu0 0
      %637 = vmatprep.subr.bf16.mxu0 0
      %638 = vmatpush1.bf16.msra.mxu0 0
      %639 = vmatprep.subr.bf16.mxu0 0
      %640 = vmatpush1.bf16.msra.mxu0 0
      %641 = vmatprep.mubr.bf16.mxu0 0
      %642 = vmatmul.mubr.bf16.gmra.mrb[0].mxu0 %v607
      %v643 = vpop.f32.mrb[0].mxu0
      %v644 = vadd.f32 %v592, %v643
      %v645 = vpop.f32.mrb[0].mxu0
      %v646 = vpop.f32.mrb[0].mxu0
      %v647 = vadd.f32 %v592, %v646
      %v648 = vpop.f32.mrb[0].mxu0
      %649 = vdwg.mxu0
      %v650 = vld [vmem:[%s5] sm:$0xff]
      %v651 = vld [vmem:[%s5 + $0x8] sm:$0xff]
      %v652 = vld [vmem:[%s5 + $0x10] sm:$0xff]
      %v653 = vld [vmem:[%s5 + $0x18] sm:$0xff]
      %v654 = vld [vmem:[%s5 + $0x20] sm:$0xff]
      %v655 = vld [vmem:[%s5 + $0x28] sm:$0xff]
      %v656 = vld [vmem:[%s5 + $0x30] sm:$0xff]
      %v657 = vld [vmem:[%s5 + $0x38] sm:$0xff]
      %v658 = vld [vmem:[%s5 + $0x40] sm:$0xff]
      %v659 = vld [vmem:[%s5 + $0x48] sm:$0xff]
      %v660 = vld [vmem:[%s5 + $0x50] sm:$0xff]
      %v661 = vld [vmem:[%s5 + $0x58] sm:$0xff]
      %v662 = vld [vmem:[%s5 + $0x60] sm:$0xff]
      %v663 = vld [vmem:[%s5 + $0x68] sm:$0xff]
      %v664 = vld [vmem:[%s5 + $0x70] sm:$0xff]
      %v665 = vld [vmem:[%s5 + $0x78] sm:$0xff]
      %v666 = vld [vmem:[%s5 + $0x80] sm:$0xff]
      %v667 = vld [vmem:[%s5 + $0x88] sm:$0xff]
      %v668 = vld [vmem:[%s5 + $0x90] sm:$0xff]
      %v669 = vld [vmem:[%s5 + $0x98] sm:$0xff]
      %v670 = vld [vmem:[%s5 + $0xa0] sm:$0xff]
      %v671 = vld [vmem:[%s5 + $0xa8] sm:$0xff]
      %v672 = vld [vmem:[%s5 + $0xb0] sm:$0xff]
      %v673 = vld [vmem:[%s5 + $0xb8] sm:$0xff]
      %v674 = vld [vmem:[%s5 + $0xc0] sm:$0xff]
      %v675 = vld [vmem:[%s5 + $0xc8] sm:$0xff]
      %v676 = vld [vmem:[%s5 + $0xd0] sm:$0xff]
      %v677 = vld [vmem:[%s5 + $0xd8] sm:$0xff]
      %v678 = vld [vmem:[%s5 + $0xe0] sm:$0xff]
      %v679 = vld [vmem:[%s5 + $0xe8] sm:$0xff]
      %v680 = vld [vmem:[%s5 + $0xf0] sm:$0xff]
      %v681 = vld [vmem:[%s5 + $0xf8] sm:$0xff]
      %v682 = vld [vmem:[%s5 + $0x100] sm:$0xff]
      %v683 = vld [vmem:[%s5 + $0x108] sm:$0xff]
      %v684 = vld [vmem:[%s5 + $0x110] sm:$0xff]
      %v685 = vld [vmem:[%s5 + $0x118] sm:$0xff]
      %v686 = vld [vmem:[%s5 + $0x120] sm:$0xff]
      %v687 = vld [vmem:[%s5 + $0x128] sm:$0xff]
      %v688 = vld [vmem:[%s5 + $0x130] sm:$0xff]
      %v689 = vld [vmem:[%s5 + $0x138] sm:$0xff]
      %v690 = vld [vmem:[%s5 + $0x140] sm:$0xff]
      %v691 = vld [vmem:[%s5 + $0x148] sm:$0xff]
      %v692 = vld [vmem:[%s5 + $0x150] sm:$0xff]
      %v693 = vld [vmem:[%s5 + $0x158] sm:$0xff]
      %v694 = vld [vmem:[%s5 + $0x160] sm:$0xff]
      %v695 = vld [vmem:[%s5 + $0x168] sm:$0xff]
      %v696 = vld [vmem:[%s5 + $0x170] sm:$0xff]
      %v697 = vld [vmem:[%s5 + $0x178] sm:$0xff]
      %v698 = vld [vmem:[%s5 + $0x180] sm:$0xff]
      %v699 = vld [vmem:[%s5 + $0x188] sm:$0xff]
      %v700 = vld [vmem:[%s5 + $0x190] sm:$0xff]
      %v701 = vld [vmem:[%s5 + $0x198] sm:$0xff]
      %v702 = vld [vmem:[%s5 + $0x1a0] sm:$0xff]
      %v703 = vld [vmem:[%s5 + $0x1a8] sm:$0xff]
      %v704 = vld [vmem:[%s5 + $0x1b0] sm:$0xff]
      %v705 = vld [vmem:[%s5 + $0x1b8] sm:$0xff]
      %v706 = vld [vmem:[%s5 + $0x1c0] sm:$0xff]
      %v707 = vld [vmem:[%s5 + $0x1c8] sm:$0xff]
      %v708 = vld [vmem:[%s5 + $0x1d0] sm:$0xff]
      %v709 = vld [vmem:[%s5 + $0x1d8] sm:$0xff]
      %v710 = vld [vmem:[%s5 + $0x1e0] sm:$0xff]
      %v711 = vld [vmem:[%s5 + $0x1e8] sm:$0xff]
      %v712 = vld [vmem:[%s5 + $0x1f0] sm:$0xff]
      %v713 = vld [vmem:[%s5 + $0x1f8] sm:$0xff]
      %v714 = vld [vmem:[%s6] sm:$0xff]
      %v716 = vlaneseq
      %v717 = vshrl.u32 %v716, 7
      %v718 = vsub.s32 0, %v717
      %v719 = vrot.slane %v714, %v718
      %v720 = vlaneseq
      %v721 = vshrl.u32 %v720, 7
      %v722 = vsub.s32 1, %v721
      %v723 = vrot.slane %v714, %v722
      %v724 = vlaneseq
      %v725 = vshrl.u32 %v724, 7
      %v726 = vsub.s32 2, %v725
      %v727 = vrot.slane %v714, %v726
      %v728 = vlaneseq
      %v729 = vshrl.u32 %v728, 7
      %v730 = vsub.s32 3, %v729
      %v731 = vrot.slane %v714, %v730
      %v732 = vlaneseq
      %v733 = vshrl.u32 %v732, 7
      %v734 = vsub.s32 4, %v733
      %v735 = vrot.slane %v714, %v734
      %v736 = vlaneseq
      %v737 = vshrl.u32 %v736, 7
      %v738 = vsub.s32 5, %v737
      %v739 = vrot.slane %v714, %v738
      %v740 = vlaneseq
      %v741 = vshrl.u32 %v740, 7
      %v742 = vsub.s32 6, %v741
      %v743 = vrot.slane %v714, %v742
      %v744 = vlaneseq
      %v745 = vshrl.u32 %v744, 7
      %v746 = vsub.s32 7, %v745
      %v747 = vrot.slane %v714, %v746
      %v758 = vunpack.c.l.b16 %v581
      %v759 = vunpack.c.l.b16 %v582
      %v760 = vpack.c.b16 %v759, %v758
      %v826 = vunpack.c.l.b16 %v650
      %v827 = vunpack.c.h.b16 %v650
      %v828 = vunpack.c.l.b16 %v651
      %v829 = vunpack.c.h.b16 %v651
      %v830 = vunpack.c.l.b16 %v652
      %v831 = vunpack.c.h.b16 %v652
      %v832 = vunpack.c.l.b16 %v653
      %v833 = vunpack.c.h.b16 %v653
      %v834 = vunpack.c.l.b16 %v654
      %v835 = vunpack.c.h.b16 %v654
      %v836 = vunpack.c.l.b16 %v655
      %v837 = vunpack.c.h.b16 %v655
      %v838 = vunpack.c.l.b16 %v656
      %v839 = vunpack.c.h.b16 %v656
      %v840 = vunpack.c.l.b16 %v657
      %v841 = vunpack.c.h.b16 %v657
      %v842 = vunpack.c.l.b16 %v658
      %v843 = vunpack.c.h.b16 %v658
      %v844 = vunpack.c.l.b16 %v659
      %v845 = vunpack.c.h.b16 %v659
      %v846 = vunpack.c.l.b16 %v660
      %v847 = vunpack.c.h.b16 %v660
      %v848 = vunpack.c.l.b16 %v661
      %v849 = vunpack.c.h.b16 %v661
      %v850 = vunpack.c.l.b16 %v662
      %v851 = vunpack.c.h.b16 %v662
      %v852 = vunpack.c.l.b16 %v663
      %v853 = vunpack.c.h.b16 %v663
      %v854 = vunpack.c.l.b16 %v664
      %v855 = vunpack.c.h.b16 %v664
      %v856 = vunpack.c.l.b16 %v665
      %v857 = vunpack.c.h.b16 %v665
      %v858 = vunpack.c.l.b16 %v666
      %v859 = vunpack.c.h.b16 %v666
      %v860 = vunpack.c.l.b16 %v667
      %v861 = vunpack.c.h.b16 %v667
      %v862 = vunpack.c.l.b16 %v668
      %v863 = vunpack.c.h.b16 %v668
      %v864 = vunpack.c.l.b16 %v669
      %v865 = vunpack.c.h.b16 %v669
      %v866 = vunpack.c.l.b16 %v670
      %v867 = vunpack.c.h.b16 %v670
      %v868 = vunpack.c.l.b16 %v671
      %v869 = vunpack.c.h.b16 %v671
      %v870 = vunpack.c.l.b16 %v672
      %v871 = vunpack.c.h.b16 %v672
      %v872 = vunpack.c.l.b16 %v673
      %v873 = vunpack.c.h.b16 %v673
      %v874 = vunpack.c.l.b16 %v674
      %v875 = vunpack.c.h.b16 %v674
      %v876 = vunpack.c.l.b16 %v675
      %v877 = vunpack.c.h.b16 %v675
      %v878 = vunpack.c.l.b16 %v676
      %v879 = vunpack.c.h.b16 %v676
      %v880 = vunpack.c.l.b16 %v677
      %v881 = vunpack.c.h.b16 %v677
      %v882 = vunpack.c.l.b16 %v678
      %v883 = vunpack.c.h.b16 %v678
      %v884 = vunpack.c.l.b16 %v679
      %v885 = vunpack.c.h.b16 %v679
      %v886 = vunpack.c.l.b16 %v680
      %v887 = vunpack.c.h.b16 %v680
      %v888 = vunpack.c.l.b16 %v681
      %v889 = vunpack.c.h.b16 %v681
      %v890 = vunpack.c.l.b16 %v682
      %v891 = vunpack.c.h.b16 %v682
      %v892 = vunpack.c.l.b16 %v683
      %v893 = vunpack.c.h.b16 %v683
      %v894 = vunpack.c.l.b16 %v684
      %v895 = vunpack.c.h.b16 %v684
      %v896 = vunpack.c.l.b16 %v685
      %v897 = vunpack.c.h.b16 %v685
      %v898 = vunpack.c.l.b16 %v686
      %v899 = vunpack.c.h.b16 %v686
      %v900 = vunpack.c.l.b16 %v687
      %v901 = vunpack.c.h.b16 %v687
      %v902 = vunpack.c.l.b16 %v688
      %v903 = vunpack.c.h.b16 %v688
      %v904 = vunpack.c.l.b16 %v689
      %v905 = vunpack.c.h.b16 %v689
      %v906 = vunpack.c.l.b16 %v690
      %v907 = vunpack.c.h.b16 %v690
      %v908 = vunpack.c.l.b16 %v691
      %v909 = vunpack.c.h.b16 %v691
      %v910 = vunpack.c.l.b16 %v692
      %v911 = vunpack.c.h.b16 %v692
      %v912 = vunpack.c.l.b16 %v693
      %v913 = vunpack.c.h.b16 %v693
      %v914 = vunpack.c.l.b16 %v694
      %v915 = vunpack.c.h.b16 %v694
      %v916 = vunpack.c.l.b16 %v695
      %v917 = vunpack.c.h.b16 %v695
      %v918 = vunpack.c.l.b16 %v696
      %v919 = vunpack.c.h.b16 %v696
      %v920 = vunpack.c.l.b16 %v697
      %v921 = vunpack.c.h.b16 %v697
      %v922 = vunpack.c.l.b16 %v698
      %v923 = vunpack.c.h.b16 %v698
      %v924 = vunpack.c.l.b16 %v699
      %v925 = vunpack.c.h.b16 %v699
      %v926 = vunpack.c.l.b16 %v700
      %v927 = vunpack.c.h.b16 %v700
      %v928 = vunpack.c.l.b16 %v701
      %v929 = vunpack.c.h.b16 %v701
      %v930 = vunpack.c.l.b16 %v702
      %v931 = vunpack.c.h.b16 %v702
      %v932 = vunpack.c.l.b16 %v703
      %v933 = vunpack.c.h.b16 %v703
      %v934 = vunpack.c.l.b16 %v704
      %v935 = vunpack.c.h.b16 %v704
      %v936 = vunpack.c.l.b16 %v705
      %v937 = vunpack.c.h.b16 %v705
      %v938 = vunpack.c.l.b16 %v706
      %v939 = vunpack.c.h.b16 %v706
      %v940 = vunpack.c.l.b16 %v707
      %v941 = vunpack.c.h.b16 %v707
      %v942 = vunpack.c.l.b16 %v708
      %v943 = vunpack.c.h.b16 %v708
      %v944 = vunpack.c.l.b16 %v709
      %v945 = vunpack.c.h.b16 %v709
      %v946 = vunpack.c.l.b16 %v710
      %v947 = vunpack.c.h.b16 %v710
      %v948 = vunpack.c.l.b16 %v711
      %v949 = vunpack.c.h.b16 %v711
      %v950 = vunpack.c.l.b16 %v712
      %v951 = vunpack.c.h.b16 %v712
      %v952 = vunpack.c.l.b16 %v713
      %v953 = vunpack.c.h.b16 %v713
      %v954 = vpack.c.b16 %v834, %v826
      %v955 = vpack.c.b16 %v835, %v827
      %v956 = vpack.c.b16 %v836, %v828
      %v957 = vpack.c.b16 %v837, %v829
      %v958 = vpack.c.b16 %v838, %v830
      %v959 = vpack.c.b16 %v839, %v831
      %v960 = vpack.c.b16 %v840, %v832
      %v961 = vpack.c.b16 %v841, %v833
      %v962 = vpack.c.b16 %v850, %v842
      %v963 = vpack.c.b16 %v851, %v843
      %v964 = vpack.c.b16 %v852, %v844
      %v965 = vpack.c.b16 %v853, %v845
      %v966 = vpack.c.b16 %v854, %v846
      %v967 = vpack.c.b16 %v855, %v847
      %v968 = vpack.c.b16 %v856, %v848
      %v969 = vpack.c.b16 %v857, %v849
      %v970 = vpack.c.b16 %v866, %v858
      %v971 = vpack.c.b16 %v867, %v859
      %v972 = vpack.c.b16 %v868, %v860
      %v973 = vpack.c.b16 %v869, %v861
      %v974 = vpack.c.b16 %v870, %v862
      %v975 = vpack.c.b16 %v871, %v863
      %v976 = vpack.c.b16 %v872, %v864
      %v977 = vpack.c.b16 %v873, %v865
      %v978 = vpack.c.b16 %v882, %v874
      %v979 = vpack.c.b16 %v883, %v875
      %v980 = vpack.c.b16 %v884, %v876
      %v981 = vpack.c.b16 %v885, %v877
      %v982 = vpack.c.b16 %v886, %v878
      %v983 = vpack.c.b16 %v887, %v879
      %v984 = vpack.c.b16 %v888, %v880
      %v985 = vpack.c.b16 %v889, %v881
      %v986 = vpack.c.b16 %v898, %v890
      %v987 = vpack.c.b16 %v899, %v891
      %v988 = vpack.c.b16 %v900, %v892
      %v989 = vpack.c.b16 %v901, %v893
      %v990 = vpack.c.b16 %v902, %v894
      %v991 = vpack.c.b16 %v903, %v895
      %v992 = vpack.c.b16 %v904, %v896
      %v993 = vpack.c.b16 %v905, %v897
      %v994 = vpack.c.b16 %v914, %v906
      %v995 = vpack.c.b16 %v915, %v907
      %v996 = vpack.c.b16 %v916, %v908
      %v997 = vpack.c.b16 %v917, %v909
      %v998 = vpack.c.b16 %v918, %v910
      %v999 = vpack.c.b16 %v919, %v911
      %v1000 = vpack.c.b16 %v920, %v912
      %v1001 = vpack.c.b16 %v921, %v913
      %v1002 = vpack.c.b16 %v930, %v922
      %v1003 = vpack.c.b16 %v931, %v923
      %v1004 = vpack.c.b16 %v932, %v924
      %v1005 = vpack.c.b16 %v933, %v925
      %v1006 = vpack.c.b16 %v934, %v926
      %v1007 = vpack.c.b16 %v935, %v927
      %v1008 = vpack.c.b16 %v936, %v928
      %v1009 = vpack.c.b16 %v937, %v929
      %v1010 = vpack.c.b16 %v946, %v938
      %v1011 = vpack.c.b16 %v947, %v939
      %v1012 = vpack.c.b16 %v948, %v940
      %v1013 = vpack.c.b16 %v949, %v941
      %v1014 = vpack.c.b16 %v950, %v942
      %v1015 = vpack.c.b16 %v951, %v943
      %v1016 = vpack.c.b16 %v952, %v944
      %v1017 = vpack.c.b16 %v953, %v945
      %1082 = vmatprep.subr.bf16.mxu0 %v955
      %1083 = vmatpush1.bf16.msra.mxu0 %v954
      %1084 = vmatprep.subr.bf16.mxu0 %v963
      %1085 = vmatpush1.bf16.msra.mxu0 %v962
      %1086 = vmatprep.subr.bf16.mxu0 %v971
      %1087 = vmatpush1.bf16.msra.mxu0 %v970
      %1088 = vmatprep.subr.bf16.mxu0 %v979
      %1089 = vmatpush1.bf16.msra.mxu0 %v978
      %1090 = vmatprep.subr.bf16.mxu0 %v987
      %1091 = vmatpush1.bf16.msra.mxu0 %v986
      %1092 = vmatprep.subr.bf16.mxu0 %v995
      %1093 = vmatpush1.bf16.msra.mxu0 %v994
      %1094 = vmatprep.subr.bf16.mxu0 %v1003
      %1095 = vmatpush1.bf16.msra.mxu0 %v1002
      %1096 = vmatprep.subr.bf16.mxu0 %v1011
      %1097 = vmatpush1.bf16.msra.mxu0 %v1010
      %1098 = vmatprep.subr.bf16.mxu0 0
      %1099 = vmatpush1.bf16.msra.mxu0 0
      %1100 = vmatprep.subr.bf16.mxu0 0
      %1101 = vmatpush1.bf16.msra.mxu0 0
      %1102 = vmatprep.subr.bf16.mxu0 0
      %1103 = vmatpush1.bf16.msra.mxu0 0
      %1104 = vmatprep.subr.bf16.mxu0 0
      %1105 = vmatpush1.bf16.msra.mxu0 0
      %1106 = vmatprep.subr.bf16.mxu0 0
      %1107 = vmatpush1.bf16.msra.mxu0 0
      %1108 = vmatprep.subr.bf16.mxu0 0
      %1109 = vmatpush1.bf16.msra.mxu0 0
      %1110 = vmatprep.subr.bf16.mxu0 0
      %1111 = vmatpush1.bf16.msra.mxu0 0
      %1112 = vmatprep.subr.bf16.mxu0 0
      %1113 = vmatpush1.bf16.msra.mxu0 0
      %1114 = vmatprep.mubr.bf16.mxu0 0
      %1115 = vmatmul.mubr.bf16.gmra.mrb[0].mxu0 %v760
      %v1116 = vpop.f32.mrb[0].mxu0
      %v1117 = vadd.f32 %v719, %v1116
      %v1118 = vpop.f32.mrb[0].mxu0
      %v1119 = vadd.f32 %v723, %v1118
      %v1120 = vpop.f32.mrb[0].mxu0
      %v1121 = vadd.f32 %v719, %v1120
      %v1122 = vpop.f32.mrb[0].mxu0
      %v1123 = vadd.f32 %v723, %v1122
      %1124 = vdwg.mxu0
      %1125 = vmatprep.subr.bf16.mxu0 %v957
      %1126 = vmatpush1.bf16.msra.mxu0 %v956
      %1127 = vmatprep.subr.bf16.mxu0 %v965
      %1128 = vmatpush1.bf16.msra.mxu0 %v964
      %1129 = vmatprep.subr.bf16.mxu0 %v973
      %1130 = vmatpush1.bf16.msra.mxu0 %v972
      %1131 = vmatprep.subr.bf16.mxu0 %v981
      %1132 = vmatpush1.bf16.msra.mxu0 %v980
      %1133 = vmatprep.subr.bf16.mxu0 %v989
      %1134 = vmatpush1.bf16.msra.mxu0 %v988
      %1135 = vmatprep.subr.bf16.mxu0 %v997
      %1136 = vmatpush1.bf16.msra.mxu0 %v996
      %1137 = vmatprep.subr.bf16.mxu0 %v1005
      %1138 = vmatpush1.bf16.msra.mxu0 %v1004
      %1139 = vmatprep.subr.bf16.mxu0 %v1013
      %1140 = vmatpush1.bf16.msra.mxu0 %v1012
      %1141 = vmatprep.subr.bf16.mxu0 0
      %1142 = vmatpush1.bf16.msra.mxu0 0
      %1143 = vmatprep.subr.bf16.mxu0 0
      %1144 = vmatpush1.bf16.msra.mxu0 0
      %1145 = vmatprep.subr.bf16.mxu0 0
      %1146 = vmatpush1.bf16.msra.mxu0 0
      %1147 = vmatprep.subr.bf16.mxu0 0
      %1148 = vmatpush1.bf16.msra.mxu0 0
      %1149 = vmatprep.subr.bf16.mxu0 0
      %1150 = vmatpush1.bf16.msra.mxu0 0
      %1151 = vmatprep.subr.bf16.mxu0 0
      %1152 = vmatpush1.bf16.msra.mxu0 0
      %1153 = vmatprep.subr.bf16.mxu0 0
      %1154 = vmatpush1.bf16.msra.mxu0 0
      %1155 = vmatprep.subr.bf16.mxu0 0
      %1156 = vmatpush1.bf16.msra.mxu0 0
      %1157 = vmatprep.mubr.bf16.mxu0 0
      %1158 = vmatmul.mubr.bf16.gmra.mrb[0].mxu0 %v760
      %v1159 = vpop.f32.mrb[0].mxu0
      %v1160 = vadd.f32 %v727, %v1159
      %v1161 = vpop.f32.mrb[0].mxu0
      %v1162 = vadd.f32 %v731, %v1161
      %v1163 = vpop.f32.mrb[0].mxu0
      %v1164 = vadd.f32 %v727, %v1163
      %v1165 = vpop.f32.mrb[0].mxu0
      %v1166 = vadd.f32 %v731, %v1165
      %1167 = vdwg.mxu0
      %1168 = vmatprep.subr.bf16.mxu0 %v959
      %1169 = vmatpush1.bf16.msra.mxu0 %v958
      %1170 = vmatprep.subr.bf16.mxu0 %v967
      %1171 = vmatpush1.bf16.msra.mxu0 %v966
      %1172 = vmatprep.subr.bf16.mxu0 %v975
      %1173 = vmatpush1.bf16.msra.mxu0 %v974
      %1174 = vmatprep.subr.bf16.mxu0 %v983
      %1175 = vmatpush1.bf16.msra.mxu0 %v982
      %1176 = vmatprep.subr.bf16.mxu0 %v991
      %1177 = vmatpush1.bf16.msra.mxu0 %v990
      %1178 = vmatprep.subr.bf16.mxu0 %v999
      %1179 = vmatpush1.bf16.msra.mxu0 %v998
      %1180 = vmatprep.subr.bf16.mxu0 %v1007
      %1181 = vmatpush1.bf16.msra.mxu0 %v1006
      %1182 = vmatprep.subr.bf16.mxu0 %v1015
      %1183 = vmatpush1.bf16.msra.mxu0 %v1014
      %1184 = vmatprep.subr.bf16.mxu0 0
      %1185 = vmatpush1.bf16.msra.mxu0 0
      %1186 = vmatprep.subr.bf16.mxu0 0
      %1187 = vmatpush1.bf16.msra.mxu0 0
      %1188 = vmatprep.subr.bf16.mxu0 0
      %1189 = vmatpush1.bf16.msra.mxu0 0
      %1190 = vmatprep.subr.bf16.mxu0 0
      %1191 = vmatpush1.bf16.msra.mxu0 0
      %1192 = vmatprep.subr.bf16.mxu0 0
      %1193 = vmatpush1.bf16.msra.mxu0 0
      %1194 = vmatprep.subr.bf16.mxu0 0
      %1195 = vmatpush1.bf16.msra.mxu0 0
      %1196 = vmatprep.subr.bf16.mxu0 0
      %1197 = vmatpush1.bf16.msra.mxu0 0
      %1198 = vmatprep.subr.bf16.mxu0 0
      %1199 = vmatpush1.bf16.msra.mxu0 0
      %1200 = vmatprep.mubr.bf16.mxu0 0
      %1201 = vmatmul.mubr.bf16.gmra.mrb[0].mxu0 %v760
      %v1202 = vpop.f32.mrb[0].mxu0
      %v1203 = vadd.f32 %v735, %v1202
      %v1204 = vpop.f32.mrb[0].mxu0
      %v1205 = vadd.f32 %v739, %v1204
      %v1206 = vpop.f32.mrb[0].mxu0
      %v1207 = vadd.f32 %v735, %v1206
      %v1208 = vpop.f32.mrb[0].mxu0
      %v1209 = vadd.f32 %v739, %v1208
      %1210 = vdwg.mxu0
      %1211 = vmatprep.subr.bf16.mxu0 %v961
      %1212 = vmatpush1.bf16.msra.mxu0 %v960
      %1213 = vmatprep.subr.bf16.mxu0 %v969
      %1214 = vmatpush1.bf16.msra.mxu0 %v968
      %1215 = vmatprep.subr.bf16.mxu0 %v977
      %1216 = vmatpush1.bf16.msra.mxu0 %v976
      %1217 = vmatprep.subr.bf16.mxu0 %v985
      %1218 = vmatpush1.bf16.msra.mxu0 %v984
      %1219 = vmatprep.subr.bf16.mxu0 %v993
      %1220 = vmatpush1.bf16.msra.mxu0 %v992
      %1221 = vmatprep.subr.bf16.mxu0 %v1001
      %1222 = vmatpush1.bf16.msra.mxu0 %v1000
      %1223 = vmatprep.subr.bf16.mxu0 %v1009
      %1224 = vmatpush1.bf16.msra.mxu0 %v1008
      %1225 = vmatprep.subr.bf16.mxu0 %v1017
      %1226 = vmatpush1.bf16.msra.mxu0 %v1016
      %1227 = vmatprep.subr.bf16.mxu0 0
      %1228 = vmatpush1.bf16.msra.mxu0 0
      %1229 = vmatprep.subr.bf16.mxu0 0
      %1230 = vmatpush1.bf16.msra.mxu0 0
      %1231 = vmatprep.subr.bf16.mxu0 0
      %1232 = vmatpush1.bf16.msra.mxu0 0
      %1233 = vmatprep.subr.bf16.mxu0 0
      %1234 = vmatpush1.bf16.msra.mxu0 0
      %1235 = vmatprep.subr.bf16.mxu0 0
      %1236 = vmatpush1.bf16.msra.mxu0 0
      %1237 = vmatprep.subr.bf16.mxu0 0
      %1238 = vmatpush1.bf16.msra.mxu0 0
      %1239 = vmatprep.subr.bf16.mxu0 0
      %1240 = vmatpush1.bf16.msra.mxu0 0
      %1241 = vmatprep.subr.bf16.mxu0 0
      %1242 = vmatpush1.bf16.msra.mxu0 0
      %1243 = vmatprep.mubr.bf16.mxu0 0
      %1244 = vmatmul.mubr.bf16.gmra.mrb[0].mxu0 %v760
      %v1245 = vpop.f32.mrb[0].mxu0
      %v1246 = vadd.f32 %v743, %v1245
      %v1247 = vpop.f32.mrb[0].mxu0
      %v1248 = vadd.f32 %v747, %v1247
      %v1249 = vpop.f32.mrb[0].mxu0
      %v1250 = vadd.f32 %v743, %v1249
      %v1251 = vpop.f32.mrb[0].mxu0
      %v1252 = vadd.f32 %v747, %v1251
      %1253 = vdwg.mxu0
      %1254 = vadd.xlane.f32.xlu0 %v644
      %v1255 = vpop.xlane.xlu0 %1254
      %1256 = vadd.xlane.f32.xlu0 %v647
      %v1257 = vpop.xlane.xlu0 %1256
      %v1258 = vrcp.pop 128.0
      %v1259 = vmul.f32 %v1255, %v1258
      %v1260 = vmul.f32 %v1257, %v1258
      %v1261 = vmul.f32 %v644, %v644
      %v1262 = vmul.f32 %v647, %v647
      %1263 = vadd.xlane.f32.xlu0 %v1261
      %v1264 = vpop.xlane.xlu0 %1263
      %1265 = vadd.xlane.f32.xlu0 %v1262
      %v1266 = vpop.xlane.xlu0 %1265
      %v1267 = vmul.f32 %v1264, %v1258
      %v1268 = vmul.f32 %v1266, %v1258
      %v1269 = vmul.f32 %v1259, %v1259
      %v1270 = vmul.f32 %v1260, %v1260
      %v1271 = vsub.f32 %v1267, %v1269
      %v1272 = vsub.f32 %v1268, %v1270
      %v1273 = vsub.f32 %v644, %v1259
      %v1274 = vsub.f32 %v647, %v1260
      %v1275 = vadd.f32 %v1271, 1e-06
      %v1276 = vadd.f32 %v1272, 1e-06
      %v1277 = vrsqrt.pop %v1275
      %v1278 = vrsqrt.pop %v1276
      %v1279 = vmul.f32 %v1273, %v1277
      %v1280 = vmul.f32 %v1274, %v1278
      %v1281 = vld [vmem:[%s7] sm:$0x1]
      %v1282 = vlaneseq
      %v1283 = vshrl.u32 %v1282, 7
      %v1284 = vsub.s32 0, %v1283
      %v1285 = vrot.slane %v1281, %v1284
      %v1286 = vmul.f32 %v1279, %v1285
      %v1287 = vmul.f32 %v1280, %v1285
      %v1288 = vld [vmem:[%s8] sm:$0x1]
      %v1289 = vlaneseq
      %v1290 = vshrl.u32 %v1289, 7
      %v1291 = vsub.s32 0, %v1290
      %v1292 = vrot.slane %v1288, %v1291
      %v1293 = vadd.f32 %v1286, %v1292
      %v1294 = vadd.f32 %v1287, %v1292
      %v1295 = vadd.f32 %v1119, 1.0
      %v1296 = vadd.f32 %v1123, 1.0
      %v1297 = vmul.f32 %v1293, %v1295
      %v1298 = vmul.f32 %v1294, %v1296
      %v1299 = vadd.f32 %v1297, %v1117
      %v1300 = vadd.f32 %v1298, %v1121
      %v1301 = vpack.c.bf16 %v1300, %v1299
      %v1302 = vld [vmem:[%s9] sm:$0xf]
      %v1303 = vld [vmem:[%s9 + $0x4] sm:$0xf]
      %v1304 = vld [vmem:[%s9 + $0x8] sm:$0xf]
      %v1305 = vld [vmem:[%s9 + $0xc] sm:$0xf]
      %v1306 = vld [vmem:[%s9 + $0x10] sm:$0xf]
      %v1307 = vld [vmem:[%s9 + $0x14] sm:$0xf]
      %v1308 = vld [vmem:[%s9 + $0x18] sm:$0xf]
      %v1309 = vld [vmem:[%s9 + $0x1c] sm:$0xf]
      %v1310 = vld [vmem:[%s9 + $0x20] sm:$0xf]
      %v1311 = vld [vmem:[%s9 + $0x24] sm:$0xf]
      %v1312 = vld [vmem:[%s9 + $0x28] sm:$0xf]
      %v1313 = vld [vmem:[%s9 + $0x2c] sm:$0xf]
      %v1314 = vld [vmem:[%s9 + $0x30] sm:$0xf]
      %v1315 = vld [vmem:[%s9 + $0x34] sm:$0xf]
      %v1316 = vld [vmem:[%s9 + $0x38] sm:$0xf]
      %v1317 = vld [vmem:[%s9 + $0x3c] sm:$0xf]
      %v1318 = vld [vmem:[%s10] sm:$0x1]
      %v1319 = vlaneseq
      %v1320 = vshrl.u32 %v1319, 7
      %v1321 = vsub.s32 0, %v1320
      %v1322 = vrot.slane %v1318, %v1321
      %v1339 = vunpack.c.l.b16 %v1302
      %v1340 = vunpack.c.l.b16 %v1303
      %v1341 = vunpack.c.l.b16 %v1304
      %v1342 = vunpack.c.l.b16 %v1305
      %v1343 = vunpack.c.l.b16 %v1306
      %v1344 = vunpack.c.l.b16 %v1307
      %v1345 = vunpack.c.l.b16 %v1308
      %v1346 = vunpack.c.l.b16 %v1309
      %v1347 = vunpack.c.l.b16 %v1310
      %v1348 = vunpack.c.l.b16 %v1311
      %v1349 = vunpack.c.l.b16 %v1312
      %v1350 = vunpack.c.l.b16 %v1313
      %v1351 = vunpack.c.l.b16 %v1314
      %v1352 = vunpack.c.l.b16 %v1315
      %v1353 = vunpack.c.l.b16 %v1316
      %v1354 = vunpack.c.l.b16 %v1317
      %v1355 = vpack.c.b16 %v1340, %v1339
      %v1356 = vpack.c.b16 %v1342, %v1341
      %v1357 = vpack.c.b16 %v1344, %v1343
      %v1358 = vpack.c.b16 %v1346, %v1345
      %v1359 = vpack.c.b16 %v1348, %v1347
      %v1360 = vpack.c.b16 %v1350, %v1349
      %v1361 = vpack.c.b16 %v1352, %v1351
      %v1362 = vpack.c.b16 %v1354, %v1353
      %1371 = vmatprep.subr.bf16.mxu0 0
      %1372 = vmatpush1.bf16.msra.mxu0 %v1355
      %1373 = vmatprep.subr.bf16.mxu0 0
      %1374 = vmatpush1.bf16.msra.mxu0 %v1356
      %1375 = vmatprep.subr.bf16.mxu0 0
      %1376 = vmatpush1.bf16.msra.mxu0 %v1357
      %1377 = vmatprep.subr.bf16.mxu0 0
      %1378 = vmatpush1.bf16.msra.mxu0 %v1358
      %1379 = vmatprep.subr.bf16.mxu0 0
      %1380 = vmatpush1.bf16.msra.mxu0 %v1359
      %1381 = vmatprep.subr.bf16.mxu0 0
      %1382 = vmatpush1.bf16.msra.mxu0 %v1360
      %1383 = vmatprep.subr.bf16.mxu0 0
      %1384 = vmatpush1.bf16.msra.mxu0 %v1361
      %1385 = vmatprep.subr.bf16.mxu0 0
      %1386 = vmatpush1.bf16.msra.mxu0 %v1362
      %1387 = vmatprep.subr.bf16.mxu0 0
      %1388 = vmatpush1.bf16.msra.mxu0 0
      %1389 = vmatprep.subr.bf16.mxu0 0
      %1390 = vmatpush1.bf16.msra.mxu0 0
      %1391 = vmatprep.subr.bf16.mxu0 0
      %1392 = vmatpush1.bf16.msra.mxu0 0
      %1393 = vmatprep.subr.bf16.mxu0 0
      %1394 = vmatpush1.bf16.msra.mxu0 0
      %1395 = vmatprep.subr.bf16.mxu0 0
      %1396 = vmatpush1.bf16.msra.mxu0 0
      %1397 = vmatprep.subr.bf16.mxu0 0
      %1398 = vmatpush1.bf16.msra.mxu0 0
      %1399 = vmatprep.subr.bf16.mxu0 0
      %1400 = vmatpush1.bf16.msra.mxu0 0
      %1401 = vmatprep.subr.bf16.mxu0 0
      %1402 = vmatpush1.bf16.msra.mxu0 0
      %1403 = vmatprep.mubr.bf16.mxu0 0
      %1404 = vmatmul.mubr.bf16.gmra.mrb[0].mxu0 %v1301
      %v1405 = vpop.f32.mrb[0].mxu0
      %v1406 = vadd.f32 %v1322, %v1405
      %v1407 = vpop.f32.mrb[0].mxu0
      %v1408 = vpop.f32.mrb[0].mxu0
      %v1409 = vadd.f32 %v1322, %v1408
      %v1410 = vpop.f32.mrb[0].mxu0
      %1411 = vdwg.mxu0
      %v1412 = vxor.u32 %v1406, 2147483648
      %v1413 = vxor.u32 %v1409, 2147483648
      %v1414 = vmul.f32 %v1412, 1.442695
      %v1415 = vpow.pop %v1414
      %v1416 = vmul.f32 %v1413, 1.442695
      %v1417 = vpow.pop %v1416
      %v1418 = vadd.f32 %v1415, 1.0
      %v1419 = vadd.f32 %v1417, 1.0
      %v1420 = vrcp.pop %v1418
      %v1421 = vmul.f32 1.0, %v1420
      %v1422 = vrcp.pop %v1419
      %v1423 = vmul.f32 1.0, %v1422
      %v1424 = vmul.f32 %v1406, %v1421
      %v1425 = vmul.f32 %v1409, %v1423
      %v1426 = vpack.c.bf16 %v1425, %v1424
      %v1427 = vld [vmem:[%s11] sm:$0xf]
      %v1428 = vld [vmem:[%s11 + $0x4] sm:$0xf]
      %v1429 = vld [vmem:[%s11 + $0x8] sm:$0xf]
      %v1430 = vld [vmem:[%s11 + $0xc] sm:$0xf]
      %v1431 = vld [vmem:[%s11 + $0x10] sm:$0xf]
      %v1432 = vld [vmem:[%s11 + $0x14] sm:$0xf]
      %v1433 = vld [vmem:[%s11 + $0x18] sm:$0xf]
      %v1434 = vld [vmem:[%s11 + $0x1c] sm:$0xf]
      %v1435 = vld [vmem:[%s11 + $0x20] sm:$0xf]
      %v1436 = vld [vmem:[%s11 + $0x24] sm:$0xf]
      %v1437 = vld [vmem:[%s11 + $0x28] sm:$0xf]
      %v1438 = vld [vmem:[%s11 + $0x2c] sm:$0xf]
      %v1439 = vld [vmem:[%s11 + $0x30] sm:$0xf]
      %v1440 = vld [vmem:[%s11 + $0x34] sm:$0xf]
      %v1441 = vld [vmem:[%s11 + $0x38] sm:$0xf]
      %v1442 = vld [vmem:[%s11 + $0x3c] sm:$0xf]
      %v1443 = vld [vmem:[%s12] sm:$0x1]
      %v1444 = vlaneseq
      %v1445 = vshrl.u32 %v1444, 7
      %v1446 = vsub.s32 0, %v1445
      %v1447 = vrot.slane %v1443, %v1446
      %v1464 = vunpack.c.l.b16 %v1427
      %v1465 = vunpack.c.l.b16 %v1428
      %v1466 = vunpack.c.l.b16 %v1429
      %v1467 = vunpack.c.l.b16 %v1430
      %v1468 = vunpack.c.l.b16 %v1431
      %v1469 = vunpack.c.l.b16 %v1432
      %v1470 = vunpack.c.l.b16 %v1433
      %v1471 = vunpack.c.l.b16 %v1434
      %v1472 = vunpack.c.l.b16 %v1435
      %v1473 = vunpack.c.l.b16 %v1436
      %v1474 = vunpack.c.l.b16 %v1437
      %v1475 = vunpack.c.l.b16 %v1438
      %v1476 = vunpack.c.l.b16 %v1439
      %v1477 = vunpack.c.l.b16 %v1440
      %v1478 = vunpack.c.l.b16 %v1441
      %v1479 = vunpack.c.l.b16 %v1442
      %v1480 = vpack.c.b16 %v1465, %v1464
      %v1481 = vpack.c.b16 %v1467, %v1466
      %v1482 = vpack.c.b16 %v1469, %v1468
      %v1483 = vpack.c.b16 %v1471, %v1470
      %v1484 = vpack.c.b16 %v1473, %v1472
      %v1485 = vpack.c.b16 %v1475, %v1474
      %v1486 = vpack.c.b16 %v1477, %v1476
      %v1487 = vpack.c.b16 %v1479, %v1478
      %1496 = vmatprep.subr.bf16.mxu0 0
      %1497 = vmatpush1.bf16.msra.mxu0 %v1480
      %1498 = vmatprep.subr.bf16.mxu0 0
      %1499 = vmatpush1.bf16.msra.mxu0 %v1481
      %1500 = vmatprep.subr.bf16.mxu0 0
      %1501 = vmatpush1.bf16.msra.mxu0 %v1482
      %1502 = vmatprep.subr.bf16.mxu0 0
      %1503 = vmatpush1.bf16.msra.mxu0 %v1483
      %1504 = vmatprep.subr.bf16.mxu0 0
      %1505 = vmatpush1.bf16.msra.mxu0 %v1484
      %1506 = vmatprep.subr.bf16.mxu0 0
      %1507 = vmatpush1.bf16.msra.mxu0 %v1485
      %1508 = vmatprep.subr.bf16.mxu0 0
      %1509 = vmatpush1.bf16.msra.mxu0 %v1486
      %1510 = vmatprep.subr.bf16.mxu0 0
      %1511 = vmatpush1.bf16.msra.mxu0 %v1487
      %1512 = vmatprep.subr.bf16.mxu0 0
      %1513 = vmatpush1.bf16.msra.mxu0 0
      %1514 = vmatprep.subr.bf16.mxu0 0
      %1515 = vmatpush1.bf16.msra.mxu0 0
      %1516 = vmatprep.subr.bf16.mxu0 0
      %1517 = vmatpush1.bf16.msra.mxu0 0
      %1518 = vmatprep.subr.bf16.mxu0 0
      %1519 = vmatpush1.bf16.msra.mxu0 0
      %1520 = vmatprep.subr.bf16.mxu0 0
      %1521 = vmatpush1.bf16.msra.mxu0 0
      %1522 = vmatprep.subr.bf16.mxu0 0
      %1523 = vmatpush1.bf16.msra.mxu0 0
      %1524 = vmatprep.subr.bf16.mxu0 0
      %1525 = vmatpush1.bf16.msra.mxu0 0
      %1526 = vmatprep.subr.bf16.mxu0 0
      %1527 = vmatpush1.bf16.msra.mxu0 0
      %1528 = vmatprep.mubr.bf16.mxu0 0
      %1529 = vmatmul.mubr.bf16.gmra.mrb[0].mxu0 %v1426
      %v1530 = vpop.f32.mrb[0].mxu0
      %v1531 = vadd.f32 %v1447, %v1530
      %v1532 = vpop.f32.mrb[0].mxu0
      %v1533 = vpop.f32.mrb[0].mxu0
      %v1534 = vadd.f32 %v1447, %v1533
      %v1535 = vpop.f32.mrb[0].mxu0
      %1536 = vdwg.mxu0
      %v1537 = vmul.f32 %v1160, %v1531
      %v1538 = vmul.f32 %v1164, %v1534
      %v1539 = vadd.f32 %v644, %v1537
      %v1540 = vadd.f32 %v647, %v1538
      %1541 = vadd.xlane.f32.xlu0 %v1539
      %v1542 = vpop.xlane.xlu0 %1541
      %1543 = vadd.xlane.f32.xlu0 %v1540
      %v1544 = vpop.xlane.xlu0 %1543
      %v1545 = vmul.f32 %v1542, %v1258
      %v1546 = vmul.f32 %v1544, %v1258
      %v1547 = vmul.f32 %v1539, %v1539
      %v1548 = vmul.f32 %v1540, %v1540
      %1549 = vadd.xlane.f32.xlu0 %v1547
      %v1550 = vpop.xlane.xlu0 %1549
      %1551 = vadd.xlane.f32.xlu0 %v1548
      %v1552 = vpop.xlane.xlu0 %1551
      %v1553 = vmul.f32 %v1550, %v1258
      %v1554 = vmul.f32 %v1552, %v1258
      %v1555 = vmul.f32 %v1545, %v1545
      %v1556 = vmul.f32 %v1546, %v1546
      %v1557 = vsub.f32 %v1553, %v1555
      %v1558 = vsub.f32 %v1554, %v1556
      %v1559 = vsub.f32 %v1539, %v1545
      %v1560 = vsub.f32 %v1540, %v1546
      %v1561 = vadd.f32 %v1557, 1e-06
      %v1562 = vadd.f32 %v1558, 1e-06
      %v1563 = vrsqrt.pop %v1561
      %v1564 = vrsqrt.pop %v1562
      %v1565 = vmul.f32 %v1559, %v1563
      %v1566 = vmul.f32 %v1560, %v1564
      %v1567 = vld [vmem:[%s7 + $0x1] sm:$0x1]
      %v1568 = vlaneseq
      %v1569 = vshrl.u32 %v1568, 7
      %v1570 = vsub.s32 0, %v1569
      %v1571 = vrot.slane %v1567, %v1570
      %v1572 = vmul.f32 %v1565, %v1571
      %v1573 = vmul.f32 %v1566, %v1571
      %v1574 = vld [vmem:[%s8 + $0x1] sm:$0x1]
      %v1575 = vlaneseq
      %v1576 = vshrl.u32 %v1575, 7
      %v1577 = vsub.s32 0, %v1576
      %v1578 = vrot.slane %v1574, %v1577
      %v1579 = vadd.f32 %v1572, %v1578
      %v1580 = vadd.f32 %v1573, %v1578
      %v1581 = vadd.f32 %v1203, 1.0
      %v1582 = vadd.f32 %v1207, 1.0
      %v1583 = vmul.f32 %v1579, %v1581
      %v1584 = vmul.f32 %v1580, %v1582
      %v1585 = vadd.f32 %v1583, %v1162
      %v1586 = vadd.f32 %v1584, %v1166
      %v1587 = vpack.c.bf16 %v1586, %v1585
      %s1588 = scalar_lea.vmem %s9, 64
      %v1589 = vld [vmem:[%s1588] sm:$0xf]
      %v1590 = vld [vmem:[%s1588 + $0x4] sm:$0xf]
      %v1591 = vld [vmem:[%s1588 + $0x8] sm:$0xf]
      %v1592 = vld [vmem:[%s1588 + $0xc] sm:$0xf]
      %v1593 = vld [vmem:[%s1588 + $0x10] sm:$0xf]
      %v1594 = vld [vmem:[%s1588 + $0x14] sm:$0xf]
      %v1595 = vld [vmem:[%s1588 + $0x18] sm:$0xf]
      %v1596 = vld [vmem:[%s1588 + $0x1c] sm:$0xf]
      %v1597 = vld [vmem:[%s1588 + $0x20] sm:$0xf]
      %v1598 = vld [vmem:[%s1588 + $0x24] sm:$0xf]
      %v1599 = vld [vmem:[%s1588 + $0x28] sm:$0xf]
      %v1600 = vld [vmem:[%s1588 + $0x2c] sm:$0xf]
      %v1601 = vld [vmem:[%s1588 + $0x30] sm:$0xf]
      %v1602 = vld [vmem:[%s1588 + $0x34] sm:$0xf]
      %v1603 = vld [vmem:[%s1588 + $0x38] sm:$0xf]
      %v1604 = vld [vmem:[%s1588 + $0x3c] sm:$0xf]
      %v1605 = vld [vmem:[%s10 + $0x1] sm:$0x1]
      %v1606 = vlaneseq
      %v1607 = vshrl.u32 %v1606, 7
      %v1608 = vsub.s32 0, %v1607
      %v1609 = vrot.slane %v1605, %v1608
      %v1626 = vunpack.c.l.b16 %v1589
      %v1627 = vunpack.c.l.b16 %v1590
      %v1628 = vunpack.c.l.b16 %v1591
      %v1629 = vunpack.c.l.b16 %v1592
      %v1630 = vunpack.c.l.b16 %v1593
      %v1631 = vunpack.c.l.b16 %v1594
      %v1632 = vunpack.c.l.b16 %v1595
      %v1633 = vunpack.c.l.b16 %v1596
      %v1634 = vunpack.c.l.b16 %v1597
      %v1635 = vunpack.c.l.b16 %v1598
      %v1636 = vunpack.c.l.b16 %v1599
      %v1637 = vunpack.c.l.b16 %v1600
      %v1638 = vunpack.c.l.b16 %v1601
      %v1639 = vunpack.c.l.b16 %v1602
      %v1640 = vunpack.c.l.b16 %v1603
      %v1641 = vunpack.c.l.b16 %v1604
      %v1642 = vpack.c.b16 %v1627, %v1626
      %v1643 = vpack.c.b16 %v1629, %v1628
      %v1644 = vpack.c.b16 %v1631, %v1630
      %v1645 = vpack.c.b16 %v1633, %v1632
      %v1646 = vpack.c.b16 %v1635, %v1634
      %v1647 = vpack.c.b16 %v1637, %v1636
      %v1648 = vpack.c.b16 %v1639, %v1638
      %v1649 = vpack.c.b16 %v1641, %v1640
      %1658 = vmatprep.subr.bf16.mxu0 0
      %1659 = vmatpush1.bf16.msra.mxu0 %v1642
      %1660 = vmatprep.subr.bf16.mxu0 0
      %1661 = vmatpush1.bf16.msra.mxu0 %v1643
      %1662 = vmatprep.subr.bf16.mxu0 0
      %1663 = vmatpush1.bf16.msra.mxu0 %v1644
      %1664 = vmatprep.subr.bf16.mxu0 0
      %1665 = vmatpush1.bf16.msra.mxu0 %v1645
      %1666 = vmatprep.subr.bf16.mxu0 0
      %1667 = vmatpush1.bf16.msra.mxu0 %v1646
      %1668 = vmatprep.subr.bf16.mxu0 0
      %1669 = vmatpush1.bf16.msra.mxu0 %v1647
      %1670 = vmatprep.subr.bf16.mxu0 0
      %1671 = vmatpush1.bf16.msra.mxu0 %v1648
      %1672 = vmatprep.subr.bf16.mxu0 0
      %1673 = vmatpush1.bf16.msra.mxu0 %v1649
      %1674 = vmatprep.subr.bf16.mxu0 0
      %1675 = vmatpush1.bf16.msra.mxu0 0
      %1676 = vmatprep.subr.bf16.mxu0 0
      %1677 = vmatpush1.bf16.msra.mxu0 0
      %1678 = vmatprep.subr.bf16.mxu0 0
      %1679 = vmatpush1.bf16.msra.mxu0 0
      %1680 = vmatprep.subr.bf16.mxu0 0
      %1681 = vmatpush1.bf16.msra.mxu0 0
      %1682 = vmatprep.subr.bf16.mxu0 0
      %1683 = vmatpush1.bf16.msra.mxu0 0
      %1684 = vmatprep.subr.bf16.mxu0 0
      %1685 = vmatpush1.bf16.msra.mxu0 0
      %1686 = vmatprep.subr.bf16.mxu0 0
      %1687 = vmatpush1.bf16.msra.mxu0 0
      %1688 = vmatprep.subr.bf16.mxu0 0
      %1689 = vmatpush1.bf16.msra.mxu0 0
      %1690 = vmatprep.mubr.bf16.mxu0 0
      %1691 = vmatmul.mubr.bf16.gmra.mrb[0].mxu0 %v1587
      %v1692 = vpop.f32.mrb[0].mxu0
      %v1693 = vadd.f32 %v1609, %v1692
      %v1694 = vpop.f32.mrb[0].mxu0
      %v1695 = vpop.f32.mrb[0].mxu0
      %v1696 = vadd.f32 %v1609, %v1695
      %v1697 = vpop.f32.mrb[0].mxu0
      %1698 = vdwg.mxu0
      %v1699 = vxor.u32 %v1693, 2147483648
      %v1700 = vxor.u32 %v1696, 2147483648
      %v1701 = vmul.f32 %v1699, 1.442695
      %v1702 = vpow.pop %v1701
      %v1703 = vmul.f32 %v1700, 1.442695
      %v1704 = vpow.pop %v1703
      %v1705 = vadd.f32 %v1702, 1.0
      %v1706 = vadd.f32 %v1704, 1.0
      %v1707 = vrcp.pop %v1705
      %v1708 = vmul.f32 1.0, %v1707
      %v1709 = vrcp.pop %v1706
      %v1710 = vmul.f32 1.0, %v1709
      %v1711 = vmul.f32 %v1693, %v1708
      %v1712 = vmul.f32 %v1696, %v1710
      %v1713 = vpack.c.bf16 %v1712, %v1711
      %s1714 = scalar_lea.vmem %s11, 64
      %v1715 = vld [vmem:[%s1714] sm:$0xf]
      %v1716 = vld [vmem:[%s1714 + $0x4] sm:$0xf]
      %v1717 = vld [vmem:[%s1714 + $0x8] sm:$0xf]
      %v1718 = vld [vmem:[%s1714 + $0xc] sm:$0xf]
      %v1719 = vld [vmem:[%s1714 + $0x10] sm:$0xf]
      %v1720 = vld [vmem:[%s1714 + $0x14] sm:$0xf]
      %v1721 = vld [vmem:[%s1714 + $0x18] sm:$0xf]
      %v1722 = vld [vmem:[%s1714 + $0x1c] sm:$0xf]
      %v1723 = vld [vmem:[%s1714 + $0x20] sm:$0xf]
      %v1724 = vld [vmem:[%s1714 + $0x24] sm:$0xf]
      %v1725 = vld [vmem:[%s1714 + $0x28] sm:$0xf]
      %v1726 = vld [vmem:[%s1714 + $0x2c] sm:$0xf]
      %v1727 = vld [vmem:[%s1714 + $0x30] sm:$0xf]
      %v1728 = vld [vmem:[%s1714 + $0x34] sm:$0xf]
      %v1729 = vld [vmem:[%s1714 + $0x38] sm:$0xf]
      %v1730 = vld [vmem:[%s1714 + $0x3c] sm:$0xf]
      %v1731 = vld [vmem:[%s12 + $0x1] sm:$0x1]
      %v1732 = vlaneseq
      %v1733 = vshrl.u32 %v1732, 7
      %v1734 = vsub.s32 0, %v1733
      %v1735 = vrot.slane %v1731, %v1734
      %v1752 = vunpack.c.l.b16 %v1715
      %v1753 = vunpack.c.l.b16 %v1716
      %v1754 = vunpack.c.l.b16 %v1717
      %v1755 = vunpack.c.l.b16 %v1718
      %v1756 = vunpack.c.l.b16 %v1719
      %v1757 = vunpack.c.l.b16 %v1720
      %v1758 = vunpack.c.l.b16 %v1721
      %v1759 = vunpack.c.l.b16 %v1722
      %v1760 = vunpack.c.l.b16 %v1723
      %v1761 = vunpack.c.l.b16 %v1724
      %v1762 = vunpack.c.l.b16 %v1725
      %v1763 = vunpack.c.l.b16 %v1726
      %v1764 = vunpack.c.l.b16 %v1727
      %v1765 = vunpack.c.l.b16 %v1728
      %v1766 = vunpack.c.l.b16 %v1729
      %v1767 = vunpack.c.l.b16 %v1730
      %v1768 = vpack.c.b16 %v1753, %v1752
      %v1769 = vpack.c.b16 %v1755, %v1754
      %v1770 = vpack.c.b16 %v1757, %v1756
      %v1771 = vpack.c.b16 %v1759, %v1758
      %v1772 = vpack.c.b16 %v1761, %v1760
      %v1773 = vpack.c.b16 %v1763, %v1762
      %v1774 = vpack.c.b16 %v1765, %v1764
      %v1775 = vpack.c.b16 %v1767, %v1766
      %1784 = vmatprep.subr.bf16.mxu0 0
      %1785 = vmatpush1.bf16.msra.mxu0 %v1768
      %1786 = vmatprep.subr.bf16.mxu0 0
      %1787 = vmatpush1.bf16.msra.mxu0 %v1769
      %1788 = vmatprep.subr.bf16.mxu0 0
      %1789 = vmatpush1.bf16.msra.mxu0 %v1770
      %1790 = vmatprep.subr.bf16.mxu0 0
      %1791 = vmatpush1.bf16.msra.mxu0 %v1771
      %1792 = vmatprep.subr.bf16.mxu0 0
      %1793 = vmatpush1.bf16.msra.mxu0 %v1772
      %1794 = vmatprep.subr.bf16.mxu0 0
      %1795 = vmatpush1.bf16.msra.mxu0 %v1773
      %1796 = vmatprep.subr.bf16.mxu0 0
      %1797 = vmatpush1.bf16.msra.mxu0 %v1774
      %1798 = vmatprep.subr.bf16.mxu0 0
      %1799 = vmatpush1.bf16.msra.mxu0 %v1775
      %1800 = vmatprep.subr.bf16.mxu0 0
      %1801 = vmatpush1.bf16.msra.mxu0 0
      %1802 = vmatprep.subr.bf16.mxu0 0
      %1803 = vmatpush1.bf16.msra.mxu0 0
      %1804 = vmatprep.subr.bf16.mxu0 0
      %1805 = vmatpush1.bf16.msra.mxu0 0
      %1806 = vmatprep.subr.bf16.mxu0 0
      %1807 = vmatpush1.bf16.msra.mxu0 0
      %1808 = vmatprep.subr.bf16.mxu0 0
      %1809 = vmatpush1.bf16.msra.mxu0 0
      %1810 = vmatprep.subr.bf16.mxu0 0
      %1811 = vmatpush1.bf16.msra.mxu0 0
      %1812 = vmatprep.subr.bf16.mxu0 0
      %1813 = vmatpush1.bf16.msra.mxu0 0
      %1814 = vmatprep.subr.bf16.mxu0 0
      %1815 = vmatpush1.bf16.msra.mxu0 0
      %1816 = vmatprep.mubr.bf16.mxu0 0
      %1817 = vmatmul.mubr.bf16.gmra.mrb[0].mxu0 %v1713
      %v1818 = vpop.f32.mrb[0].mxu0
      %v1819 = vadd.f32 %v1735, %v1818
      %v1820 = vpop.f32.mrb[0].mxu0
      %v1821 = vpop.f32.mrb[0].mxu0
      %v1822 = vadd.f32 %v1735, %v1821
      %v1823 = vpop.f32.mrb[0].mxu0
      %1824 = vdwg.mxu0
      %v1825 = vmul.f32 %v1205, %v1819
      %v1826 = vmul.f32 %v1209, %v1822
      %v1827 = vadd.f32 %v1539, %v1825
      %v1828 = vadd.f32 %v1540, %v1826
      %1829 = vadd.xlane.f32.xlu0 %v1827
      %v1830 = vpop.xlane.xlu0 %1829
      %1831 = vadd.xlane.f32.xlu0 %v1828
      %v1832 = vpop.xlane.xlu0 %1831
      %v1833 = vmul.f32 %v1830, %v1258
      %v1834 = vmul.f32 %v1832, %v1258
      %v1835 = vmul.f32 %v1827, %v1827
      %v1836 = vmul.f32 %v1828, %v1828
      %1837 = vadd.xlane.f32.xlu0 %v1835
      %v1838 = vpop.xlane.xlu0 %1837
      %1839 = vadd.xlane.f32.xlu0 %v1836
      %v1840 = vpop.xlane.xlu0 %1839
      %v1841 = vmul.f32 %v1838, %v1258
      %v1842 = vmul.f32 %v1840, %v1258
      %v1843 = vmul.f32 %v1833, %v1833
      %v1844 = vmul.f32 %v1834, %v1834
      %v1845 = vsub.f32 %v1841, %v1843
      %v1846 = vsub.f32 %v1842, %v1844
      %v1847 = vsub.f32 %v1827, %v1833
      %v1848 = vsub.f32 %v1828, %v1834
      %v1849 = vadd.f32 %v1845, 1e-06
      %v1850 = vadd.f32 %v1846, 1e-06
      %v1851 = vrsqrt.pop %v1849
      %v1852 = vrsqrt.pop %v1850
      %v1853 = vmul.f32 %v1847, %v1851
      %v1854 = vmul.f32 %v1848, %v1852
      %v1855 = vadd.f32 %v1248, 1.0
      %v1856 = vadd.f32 %v1252, 1.0
      %v1857 = vmul.f32 %v1853, %v1855
      %v1858 = vmul.f32 %v1854, %v1856
      %v1859 = vadd.f32 %v1857, %v1246
      %v1860 = vadd.f32 %v1858, %v1250
      %v1861 = vpack.c.bf16 %v1860, %v1859
      %v1862 = vld [vmem:[%s13] sm:$0xf]
      %v1863 = vld [vmem:[%s13 + $0x4] sm:$0xf]
      %v1864 = vld [vmem:[%s13 + $0x8] sm:$0xf]
      %v1865 = vld [vmem:[%s13 + $0xc] sm:$0xf]
      %v1866 = vld [vmem:[%s13 + $0x10] sm:$0xf]
      %v1867 = vld [vmem:[%s13 + $0x14] sm:$0xf]
      %v1868 = vld [vmem:[%s13 + $0x18] sm:$0xf]
      %v1869 = vld [vmem:[%s13 + $0x1c] sm:$0xf]
      %v1870 = vld [vmem:[%s13 + $0x20] sm:$0xf]
      %v1871 = vld [vmem:[%s13 + $0x24] sm:$0xf]
      %v1872 = vld [vmem:[%s13 + $0x28] sm:$0xf]
      %v1873 = vld [vmem:[%s13 + $0x2c] sm:$0xf]
      %v1874 = vld [vmem:[%s13 + $0x30] sm:$0xf]
      %v1875 = vld [vmem:[%s13 + $0x34] sm:$0xf]
      %v1876 = vld [vmem:[%s13 + $0x38] sm:$0xf]
      %v1877 = vld [vmem:[%s13 + $0x3c] sm:$0xf]
      %v1878 = vld [vmem:[%s14] sm:$0x1]
      %v1880 = vlaneseq
      %v1881 = vshrl.u32 %v1880, 7
      %v1882 = vsub.s32 0, %v1881
      %v1883 = vrot.slane %v1878, %v1882
      %v1901 = vunpack.c.l.b16 %v1862
      %v1902 = vunpack.c.l.b16 %v1863
      %v1903 = vunpack.c.l.b16 %v1864
      %v1904 = vunpack.c.l.b16 %v1865
      %v1905 = vunpack.c.l.b16 %v1866
      %v1906 = vunpack.c.l.b16 %v1867
      %v1907 = vunpack.c.l.b16 %v1868
      %v1908 = vunpack.c.l.b16 %v1869
      %v1909 = vunpack.c.l.b16 %v1870
      %v1910 = vunpack.c.l.b16 %v1871
      %v1911 = vunpack.c.l.b16 %v1872
      %v1912 = vunpack.c.l.b16 %v1873
      %v1913 = vunpack.c.l.b16 %v1874
      %v1914 = vunpack.c.l.b16 %v1875
      %v1915 = vunpack.c.l.b16 %v1876
      %v1916 = vunpack.c.l.b16 %v1877
      %v1917 = vpack.c.b16 %v1902, %v1901
      %v1918 = vpack.c.b16 %v1904, %v1903
      %v1919 = vpack.c.b16 %v1906, %v1905
      %v1920 = vpack.c.b16 %v1908, %v1907
      %v1921 = vpack.c.b16 %v1910, %v1909
      %v1922 = vpack.c.b16 %v1912, %v1911
      %v1923 = vpack.c.b16 %v1914, %v1913
      %v1924 = vpack.c.b16 %v1916, %v1915
      %1933 = vmatprep.subr.bf16.mxu0 0
      %1934 = vmatpush1.bf16.msra.mxu0 %v1917
      %1935 = vmatprep.subr.bf16.mxu0 0
      %1936 = vmatpush1.bf16.msra.mxu0 %v1918
      %1937 = vmatprep.subr.bf16.mxu0 0
      %1938 = vmatpush1.bf16.msra.mxu0 %v1919
      %1939 = vmatprep.subr.bf16.mxu0 0
      %1940 = vmatpush1.bf16.msra.mxu0 %v1920
      %1941 = vmatprep.subr.bf16.mxu0 0
      %1942 = vmatpush1.bf16.msra.mxu0 %v1921
      %1943 = vmatprep.subr.bf16.mxu0 0
      %1944 = vmatpush1.bf16.msra.mxu0 %v1922
      %1945 = vmatprep.subr.bf16.mxu0 0
      %1946 = vmatpush1.bf16.msra.mxu0 %v1923
      %1947 = vmatprep.subr.bf16.mxu0 0
      %1948 = vmatpush1.bf16.msra.mxu0 %v1924
      %1949 = vmatprep.subr.bf16.mxu0 0
      %1950 = vmatpush1.bf16.msra.mxu0 0
      %1951 = vmatprep.subr.bf16.mxu0 0
      %1952 = vmatpush1.bf16.msra.mxu0 0
      %1953 = vmatprep.subr.bf16.mxu0 0
      %1954 = vmatpush1.bf16.msra.mxu0 0
      %1955 = vmatprep.subr.bf16.mxu0 0
      %1956 = vmatpush1.bf16.msra.mxu0 0
      %1957 = vmatprep.subr.bf16.mxu0 0
      %1958 = vmatpush1.bf16.msra.mxu0 0
      %1959 = vmatprep.subr.bf16.mxu0 0
      %1960 = vmatpush1.bf16.msra.mxu0 0
      %1961 = vmatprep.subr.bf16.mxu0 0
      %1962 = vmatpush1.bf16.msra.mxu0 0
      %1963 = vmatprep.subr.bf16.mxu0 0
      %1964 = vmatpush1.bf16.msra.mxu0 0
      %1965 = vmatprep.mubr.bf16.mxu0 0
      %1966 = vmatmul.mubr.bf16.gmra.mrb[0].mxu0 %v1861
      %v1967 = vpop.f32.mrb[0].mxu0
      %v1968 = vadd.f32 %v1883, %v1967
      %v1969 = vpop.f32.mrb[0].mxu0
      %v1970 = vpop.f32.mrb[0].mxu0
      %v1971 = vadd.f32 %v1883, %v1970
      %v1972 = vpop.f32.mrb[0].mxu0
      %1973 = vdwg.mxu0
      %v1974 = vpack.c.bf16 %v1971, %v1968
      %v1976 = vunpack.c.l.b16 %v1974
      %v1977 = vunpack.c.h.b16 %v1974
      %v1978 = vpack.c.b16 %v1976, %v1976
      %v1979 = vpack.c.b16 %v1977, %v1977
      %1982 = vst [vmem:[%s574] sm:$0xf] %v1978
      %1983 = vst [vmem:[%s574 + $0x4] sm:$0xf] %v1979
      %v1984 = vld [vmem:[%s568] sm:$0xff]
      %v1985 = vld [vmem:[%s568 + $0x8] sm:$0xff]
      %v1986 = vsub.f32 %v1968, %v1984
      %v1987 = vsub.f32 %v1971, %v1985
      %v1988 = vmul.f32 %v1986, %v1986
      %v1989 = vmul.f32 %v1987, %v1987
      %v1990 = vlaneseq
      %v1991 = vshrl.u32 %v1990, 7
      %v1992 = vadd.s32 %v1991, 8
      %s1993 = smul.u32 %s28, 16
      %v1994 = vstv %s1993
      %v1995 = vadd.s32 %v1991, %v1994
      %v1996 = vadd.s32 %v1992, %v1994
      %vm1997 = vcmp.lt.s32.totalorder %v1995, 24
      %vm1998 = vcmp.lt.s32.totalorder %v1996, 24
      %v1999 = vsel %vm1997, %v1988, 0.0
      %v2000 = vsel %vm1998, %v1989, 0.0
      %v2001 = vadd.f32 %v1999, %v2000
      %2002 = vst.msk [vmem:[%s579] sm:$0xff] %vm605, %v2001
      %s2003 = smul.u32 2, %s28
      %p2004 = scmp.lt.s32.totalorder %s2003, 3
      %s2005 = scalar_select %p2004, %s2003, 3
      %s2006 = smul.addr %s2005, 4
      %s2007 = scalar_lea.vmem %s15, %s2006
      %p2008 = scmp.lt.s32.totalorder %s28, 1
      %s2009 = scalar_select %p2008, %s28, 1
      %s2010 = smul.addr %s2009, 8
      %s2011 = scalar_lea.vmem %s16, %s2010
      // Predicated region
      $region81: #{flow_loss_forward.1} parent=79 // pred_check
        %p2012 = pneg %p376
      $region82: #{flow_loss_forward.1} parent=79 // pred_check_branch
        %2014 = sbr.rel (%p2012) target = $region84
      $region83: #{flow_loss_forward.1} parent=79 // pred_region
        %s2015 = smul.u32 2, %s28
      $region84: #{flow_loss_forward.1} parent=79 // pred_fallthru
        _
      // Predicated region
      $region85: #{flow_loss_forward.1} parent=79 // pred_check
        %p2016 = pneg %p402
      $region86: #{flow_loss_forward.1} parent=79 // pred_check_branch
        %2018 = sbr.rel (%p2016) target = $region88
      $region87: #{flow_loss_forward.1} parent=79 // pred_region
        _
      $region88: #{flow_loss_forward.1} parent=79 // pred_fallthru
        _
    $region80: #{flow_loss_forward.1} parent=5 // pred_fallthru
      _
    %p2019 = scmp.le.s32.totalorder 2, %s23
    // Predicated region
    $region89: #{flow_loss_forward.1} parent=5 // pred_check
      %p2020 = pneg %p2019
    $region90: #{flow_loss_forward.1} parent=5 // pred_check_branch
      %2022 = sbr.rel (%p2020) target = $region92
    $region91: #{flow_loss_forward.1} parent=5 // pred_region
      %s2023 = ssub.s32 %s23, 2
      // Predicated region
      $region93: #{flow_loss_forward.1} parent=91 // pred_check
        %p2024 = pneg %p382
      $region94: #{flow_loss_forward.1} parent=91 // pred_check_branch
        %2026 = sbr.rel (%p2024) target = $region96
      $region95: #{flow_loss_forward.1} parent=91 // pred_region
        %s2027 = smul.u32 2, %s29
        %p2028 = scmp.lt.s32.totalorder %s2027, 3
        %s2029 = scalar_select %p2028, %s2027, 3
        %s2030 = smul.addr %s2029, 4
        %s2031 = scalar_lea.vmem %s15, %s2030
      $region96: #{flow_loss_forward.1} parent=91 // pred_fallthru
        _
      // Predicated region
      $region97: #{flow_loss_forward.1} parent=91 // pred_check
        %p2032 = pneg %p408
      $region98: #{flow_loss_forward.1} parent=91 // pred_check_branch
        %2034 = sbr.rel (%p2032) target = $region100
      $region99: #{flow_loss_forward.1} parent=91 // pred_region
        %p2035 = scmp.lt.s32.totalorder %s29, 1
        %s2036 = scalar_select %p2035, %s29, 1
        %s2037 = smul.addr %s2036, 8
        %s2038 = scalar_lea.vmem %s16, %s2037
      $region100: #{flow_loss_forward.1} parent=91 // pred_fallthru
        _
    $region92: #{flow_loss_forward.1} parent=5 // pred_fallthru
      _
  $region6: #{flow_loss_forward.1} parent=0 // loop_footer
    %s27 = sadd.s32 1, %s23
  $region7: #{flow_loss_forward.1} parent=0 // loop_footer_branch
    %22 = sbr.rel target = $region3
  $region8: #{flow_loss_forward.1} parent=0 // loop_exit
    _

</llo_original>
